<compile_context>
chip_gen: v7x
topology: tpu7x:2x2x1
jax: 0.10.0
libtpu: 0.0.40
codegen_flags: <defaults>
</compile_context>

<pallas_src>
import jax
import jax.numpy as jnp
from jax import lax
from jax.experimental import pallas as pl
from jax.experimental.pallas import tpu as pltpu


def lstm_kernel(x_ref, wih_ref, whh_ref, b_ref, wout_ref, bout_ref, out_ref):
    """Full LSTM recurrence + final Linear for one batch tile.

    x_ref    : (seq, Bt, input_size) f32
    wih_ref  : (input_size, 4H)      f32  (= weight_ih_l0.T, i/f/o cols * 0.5)
    whh_ref  : (H, 4H)               f32  (= weight_hh_l0.T, i/f/o cols * 0.5)
    b_ref    : (1, 4H)               f32  (= (b_ih + b_hh), i/f/o entries * 0.5)
    wout_ref : (out, H)              f32  (= output.weight)
    bout_ref : (1, out)              f32
    out_ref  : (Bt, out)             f32  (= predictions[-1] for this tile)
    """
    seq, B, I = x_ref.shape
    H = whh_ref.shape[0]
    G = 4 * H
    OUT = out_ref.shape[1]

    # ---- input projection + bias hoisted out of the recurrence ------------
    # Kept as a value (8 vregs at seq=8, B=8) instead of a VMEM scratch.
    x = x_ref[...]                                            # (seq, B, I)
    if I == 1:
        # input_size == 1: pure VPU broadcast multiply, no MXU round trip.
        pg = x * wih_ref[...].reshape(1, 1, G) + b_ref[...].reshape(1, 1, G)
    else:
        pg = lax.dot_general(x, wih_ref[...],
                             dimension_numbers=(((2,), (0,)), ((), ())),
                             preferred_element_type=jnp.float32)
        pg = pg + b_ref[...]

    whh = whh_ref[...]                                        # (H, 4H), loop-invariant

    h = jnp.zeros((B, H), jnp.float32)
    c = jnp.zeros((B, H), jnp.float32)

    # seq is static & small -> full static unroll; pg[t] is a static slice.
    for t in range(seq):
        gates = pg[t] + jnp.dot(h, whh, preferred_element_type=jnp.float32)
        # Single full-vreg tanh; sigmoid recovered via folded 0.5 scale:
        #   sigmoid(z) = 0.5*tanh(0.5*z) + 0.5  (0.5 already folded into
        #   the i/f/o weight/bias columns).
        tg = jnp.tanh(gates)                                  # (B, 4H), 1 EUP pass
        i_g = 0.5 * tg[:, 0 * H:1 * H] + 0.5
        f_g = 0.5 * tg[:, 1 * H:2 * H] + 0.5
        g_g = tg[:, 2 * H:3 * H]
        o_g = 0.5 * tg[:, 3 * H:4 * H] + 0.5
        c = f_g * c + i_g * g_g
        h = o_g * jnp.tanh(c)

    # ---- final Linear ------------------------------------------------------
    if OUT == 1:
        # 32-element dot product: VPU mul + cross-lane reduce beats an MXU
        # push/drain round trip on the kernel tail.
        out_ref[...] = (jnp.sum(h * wout_ref[...], axis=-1, keepdims=True)
                        + bout_ref[...])
    else:
        out_ref[...] = (lax.dot_general(h, wout_ref[...],
                                        dimension_numbers=(((1,), (1,)), ((), ())),
                                        preferred_element_type=jnp.float32)
                        + bout_ref[...])


def prepare_params(w_ih, w_hh, b_ih, b_hh, w_out, b_out):
    """Fold the sigmoid 0.5-scale into the i/f/o gate columns (gate order i,f,g,o)."""
    H = w_hh.shape[1]
    gate_scale = jnp.concatenate([
        jnp.full((H,), 0.5, jnp.float32),   # i
        jnp.full((H,), 0.5, jnp.float32),   # f
        jnp.ones((H,), jnp.float32),        # g (stays a true tanh gate)
        jnp.full((H,), 0.5, jnp.float32),   # o
    ])
    w_ih_t = w_ih.T.astype(jnp.float32) * gate_scale[None, :]          # (I, 4H)
    w_hh_t = w_hh.T.astype(jnp.float32) * gate_scale[None, :]          # (H, 4H)
    bias = ((b_ih + b_hh).astype(jnp.float32) * gate_scale).reshape(1, 4 * H)
    w_out_k = w_out.astype(jnp.float32)                                # (out, H)
    b_out_k = b_out.astype(jnp.float32).reshape(1, -1)                 # (1, out)
    return (w_ih_t, w_hh_t, bias, w_out_k, b_out_k)


def lstm_forward(input_seq, params, *, batch_tile=8):
    """Equivalent of LSTM.forward(input_seq) for input_seq of shape (batch, seq)."""
    batch, seq = input_seq.shape
    # PyTorch: input_seq.view(input_seq.shape[1], input_seq.shape[0], -1)
    # (a memory reinterpretation, not a transpose — matches the module exactly).
    x = input_seq.reshape(seq, batch, -1).astype(jnp.float32)

    w_ih_t, w_hh_t, bias, w_out, b_out = params
    I = w_ih_t.shape[0]
    H = w_hh_t.shape[0]
    OUT = w_out.shape[0]

    # Pack 8 f32 sequences per sublane tile; parallel grid over batch chunks
    # (lets v7x shard chunks across its 2 TensorCores; harmless on v5e/v6e).
    bt = batch_tile if batch % batch_tile == 0 else batch
    grid = (batch // bt,)

    pred_last = pl.pallas_call(
        lstm_kernel,
        out_shape=jax.ShapeDtypeStruct((batch, OUT), jnp.float32),
        grid=grid,
        in_specs=[
            pl.BlockSpec((seq, bt, I), lambda b: (0, b, 0)),    # x: tile over batch
            pl.BlockSpec((I, 4 * H), lambda b: (0, 0)),          # W_ih (scaled)
            pl.BlockSpec((H, 4 * H), lambda b: (0, 0)),          # W_hh (scaled)
            pl.BlockSpec((1, 4 * H), lambda b: (0, 0)),          # bias (scaled)
            pl.BlockSpec((OUT, H), lambda b: (0, 0)),            # output.weight
            pl.BlockSpec((1, OUT), lambda b: (0, 0)),            # output.bias
        ],
        out_specs=pl.BlockSpec((bt, OUT), lambda b: (b, 0)),
        compiler_params=pltpu.CompilerParams(
            dimension_semantics=("parallel",)),
    )(x, w_ih_t, w_hh_t, bias, w_out, b_out)
    return pred_last                                            # (batch, out)


def _reference_forward(input_seq, raw_params):
    """Pure-JAX reference of the same math (unscaled weights, true sigmoid)."""
    w_ih, w_hh, b_ih, b_hh, w_out, b_out = raw_params
    batch, seq = input_seq.shape
    H = w_hh.shape[1]
    x = input_seq.reshape(seq, batch, -1).astype(jnp.float32)
    h = jnp.zeros((batch, H), jnp.float32)
    c = jnp.zeros((batch, H), jnp.float32)
    for t in range(seq):
        gates = x[t] @ w_ih.T + h @ w_hh.T + b_ih + b_hh
        i = jax.nn.sigmoid(gates[:, 0 * H:1 * H])
        f = jax.nn.sigmoid(gates[:, 1 * H:2 * H])
        g = jnp.tanh(gates[:, 2 * H:3 * H])
        o = jax.nn.sigmoid(gates[:, 3 * H:4 * H])
        c = f * c + i * g
        h = o * jnp.tanh(c)
    return h @ w_out.T + b_out


if __name__ == "__main__":
    # Small shapes consistent with the module: seq=8, input_size=1, hidden=32,
    # output_size=1.  batch=16 packs two full sublane tiles (grid of 2 parallel
    # batch chunks); initial hidden/cell state is zeros as in the module.
    input_size, hidden, output_size = 1, 32, 1
    batch, seq = 16, 8

    key = jax.random.PRNGKey(0)
    ks = jax.random.split(key, 7)
    bound = float(1.0 / jnp.sqrt(hidden))

    # Deterministic init mirroring PyTorch's U(-1/sqrt(H), 1/sqrt(H)).
    w_ih = jax.random.uniform(ks[0], (4 * hidden, input_size), jnp.float32, -bound, bound)
    w_hh = jax.random.uniform(ks[1], (4 * hidden, hidden), jnp.float32, -bound, bound)
    b_ih = jax.random.uniform(ks[2], (4 * hidden,), jnp.float32, -bound, bound)
    b_hh = jax.random.uniform(ks[3], (4 * hidden,), jnp.float32, -bound, bound)
    w_out = jax.random.uniform(ks[4], (output_size, hidden), jnp.float32, -bound, bound)
    b_out = jax.random.uniform(ks[5], (output_size,), jnp.float32, -bound, bound)

    kernel_params = prepare_params(w_ih, w_hh, b_ih, b_hh, w_out, b_out)

    input_seq = jax.random.normal(ks[6], (batch, seq), jnp.float32)

    pred = lstm_forward(input_seq, kernel_params)
    jax.block_until_ready(pred)

    ref = _reference_forward(input_seq, (w_ih, w_hh, b_ih, b_hh, w_out, b_out))
    assert pred.shape == (batch, output_size)
    assert jnp.allclose(pred, ref, atol=1e-3, rtol=1e-3), (pred, ref)

    print("KERNEL_OK")
</pallas_src>

<mosaic_0001>
module attributes {stable_mosaic.version = 11 : i64} {
  func.func @lstm_kernel(%arg0: i32, %arg1: memref<8x8x1xf32, #tpu.memory_space<vmem>>, %arg2: memref<1x128xf32, #tpu.memory_space<vmem>>, %arg3: memref<32x128xf32, #tpu.memory_space<vmem>>, %arg4: memref<1x128xf32, #tpu.memory_space<vmem>>, %arg5: memref<1x32xf32, #tpu.memory_space<vmem>>, %arg6: memref<1x1xf32, #tpu.memory_space<vmem>>, %arg7: memref<8x1xf32, #tpu.memory_space<vmem>>) attributes {dimension_semantics = [#tpu.dimension_semantics<parallel>], iteration_bounds = array<i64: 2>, scalar_prefetch = 0 : i64, scratch_operands = 0 : i64, tpu.core_type = #tpu.core_type<tc>, window_params = [{transform_indices = @transform_0, window_bounds = array<i64: 8, 8, 1>}, {pipeline_mode = #tpu.pipeline_mode<synchronous>, transform_indices = @transform_1, window_bounds = array<i64: 1, 128>}, {pipeline_mode = #tpu.pipeline_mode<synchronous>, transform_indices = @transform_2, window_bounds = array<i64: 32, 128>}, {pipeline_mode = #tpu.pipeline_mode<synchronous>, transform_indices = @transform_3, window_bounds = array<i64: 1, 128>}, {pipeline_mode = #tpu.pipeline_mode<synchronous>, transform_indices = @transform_4, window_bounds = array<i64: 1, 32>}, {pipeline_mode = #tpu.pipeline_mode<synchronous>, transform_indices = @transform_5, window_bounds = array<i64: 1, 1>}, {transform_indices = @transform_6, window_bounds = array<i64: 8, 1>}]} {
    %c0 = arith.constant 0 : index
    %c0_0 = arith.constant 0 : index
    %c0_1 = arith.constant 0 : index
    %0 = vector.load %arg1[%c0, %c0_0, %c0_1] : memref<8x8x1xf32, #tpu.memory_space<vmem>>, vector<8x8x1xf32>
    %c0_2 = arith.constant 0 : index
    %c0_3 = arith.constant 0 : index
    %1 = vector.load %arg2[%c0_2, %c0_3] : memref<1x128xf32, #tpu.memory_space<vmem>>, vector<1x128xf32>
    %2 = vector.shape_cast %1 : vector<1x128xf32> to vector<1x1x128xf32>
    %3 = vector.broadcast %0 : vector<8x8x1xf32> to vector<8x8x128xf32>
    %4 = vector.broadcast %2 : vector<1x1x128xf32> to vector<8x8x128xf32>
    %5 = arith.mulf %3, %4 : vector<8x8x128xf32>
    %c0_4 = arith.constant 0 : index
    %c0_5 = arith.constant 0 : index
    %6 = vector.load %arg4[%c0_4, %c0_5] : memref<1x128xf32, #tpu.memory_space<vmem>>, vector<1x128xf32>
    %7 = vector.shape_cast %6 : vector<1x128xf32> to vector<1x1x128xf32>
    %8 = vector.broadcast %7 : vector<1x1x128xf32> to vector<8x8x128xf32>
    %9 = arith.addf %5, %8 : vector<8x8x128xf32>
    %c0_6 = arith.constant 0 : index
    %c0_7 = arith.constant 0 : index
    %10 = vector.load %arg3[%c0_6, %c0_7] : memref<32x128xf32, #tpu.memory_space<vmem>>, vector<32x128xf32>
    %cst = arith.constant 0.000000e+00 : f32
    %11 = vector.broadcast %cst : f32 to vector<8x32xf32>
    %cst_8 = arith.constant 0.000000e+00 : f32
    %12 = vector.broadcast %cst_8 : f32 to vector<8x32xf32>
    %13 = vector.extract_strided_slice %9 {offsets = [0, 0, 0], sizes = [1, 8, 128], strides = [1, 1, 1]} : vector<8x8x128xf32> to vector<1x8x128xf32>
    %14 = vector.shape_cast %13 : vector<1x8x128xf32> to vector<8x128xf32>
    %cst_9 = arith.constant dense<0.000000e+00> : vector<8x128xf32>
    %15 = tpu.matmul %11, %10, %cst_9 {dimension_numbers = #tpu.dot_dimension_numbers<[1], [0], [0], [1], [0, 0, 1, 1], [], []>} : vector<8x32xf32>, vector<32x128xf32>, vector<8x128xf32> -> vector<8x128xf32>
    %16 = arith.addf %14, %15 : vector<8x128xf32>
    %17 = math.tanh %16 : vector<8x128xf32>
    %18 = vector.extract_strided_slice %17 {offsets = [0, 0], sizes = [8, 32], strides = [1, 1]} : vector<8x128xf32> to vector<8x32xf32>
    %cst_10 = arith.constant 5.000000e-01 : f32
    %19 = vector.broadcast %cst_10 : f32 to vector<8x32xf32>
    %20 = arith.mulf %19, %18 : vector<8x32xf32>
    %cst_11 = arith.constant 5.000000e-01 : f32
    %21 = vector.broadcast %cst_11 : f32 to vector<8x32xf32>
    %22 = arith.addf %20, %21 : vector<8x32xf32>
    %23 = vector.extract_strided_slice %17 {offsets = [0, 32], sizes = [8, 32], strides = [1, 1]} : vector<8x128xf32> to vector<8x32xf32>
    %cst_12 = arith.constant 5.000000e-01 : f32
    %24 = vector.broadcast %cst_12 : f32 to vector<8x32xf32>
    %25 = arith.mulf %24, %23 : vector<8x32xf32>
    %cst_13 = arith.constant 5.000000e-01 : f32
    %26 = vector.broadcast %cst_13 : f32 to vector<8x32xf32>
    %27 = arith.addf %25, %26 : vector<8x32xf32>
    %28 = vector.extract_strided_slice %17 {offsets = [0, 64], sizes = [8, 32], strides = [1, 1]} : vector<8x128xf32> to vector<8x32xf32>
    %29 = vector.extract_strided_slice %17 {offsets = [0, 96], sizes = [8, 32], strides = [1, 1]} : vector<8x128xf32> to vector<8x32xf32>
    %cst_14 = arith.constant 5.000000e-01 : f32
    %30 = vector.broadcast %cst_14 : f32 to vector<8x32xf32>
    %31 = arith.mulf %30, %29 : vector<8x32xf32>
    %cst_15 = arith.constant 5.000000e-01 : f32
    %32 = vector.broadcast %cst_15 : f32 to vector<8x32xf32>
    %33 = arith.addf %31, %32 : vector<8x32xf32>
    %34 = arith.mulf %27, %12 : vector<8x32xf32>
    %35 = arith.mulf %22, %28 : vector<8x32xf32>
    %36 = arith.addf %34, %35 : vector<8x32xf32>
    %37 = math.tanh %36 : vector<8x32xf32>
    %38 = arith.mulf %33, %37 : vector<8x32xf32>
    %39 = vector.extract_strided_slice %9 {offsets = [1, 0, 0], sizes = [1, 8, 128], strides = [1, 1, 1]} : vector<8x8x128xf32> to vector<1x8x128xf32>
    %40 = vector.shape_cast %39 : vector<1x8x128xf32> to vector<8x128xf32>
    %cst_16 = arith.constant dense<0.000000e+00> : vector<8x128xf32>
    %41 = tpu.matmul %38, %10, %cst_16 {dimension_numbers = #tpu.dot_dimension_numbers<[1], [0], [0], [1], [0, 0, 1, 1], [], []>} : vector<8x32xf32>, vector<32x128xf32>, vector<8x128xf32> -> vector<8x128xf32>
    %42 = arith.addf %40, %41 : vector<8x128xf32>
    %43 = math.tanh %42 : vector<8x128xf32>
    %44 = vector.extract_strided_slice %43 {offsets = [0, 0], sizes = [8, 32], strides = [1, 1]} : vector<8x128xf32> to vector<8x32xf32>
    %cst_17 = arith.constant 5.000000e-01 : f32
    %45 = vector.broadcast %cst_17 : f32 to vector<8x32xf32>
    %46 = arith.mulf %45, %44 : vector<8x32xf32>
    %cst_18 = arith.constant 5.000000e-01 : f32
    %47 = vector.broadcast %cst_18 : f32 to vector<8x32xf32>
    %48 = arith.addf %46, %47 : vector<8x32xf32>
    %49 = vector.extract_strided_slice %43 {offsets = [0, 32], sizes = [8, 32], strides = [1, 1]} : vector<8x128xf32> to vector<8x32xf32>
    %cst_19 = arith.constant 5.000000e-01 : f32
    %50 = vector.broadcast %cst_19 : f32 to vector<8x32xf32>
    %51 = arith.mulf %50, %49 : vector<8x32xf32>
    %cst_20 = arith.constant 5.000000e-01 : f32
    %52 = vector.broadcast %cst_20 : f32 to vector<8x32xf32>
    %53 = arith.addf %51, %52 : vector<8x32xf32>
    %54 = vector.extract_strided_slice %43 {offsets = [0, 64], sizes = [8, 32], strides = [1, 1]} : vector<8x128xf32> to vector<8x32xf32>
    %55 = vector.extract_strided_slice %43 {offsets = [0, 96], sizes = [8, 32], strides = [1, 1]} : vector<8x128xf32> to vector<8x32xf32>
    %cst_21 = arith.constant 5.000000e-01 : f32
    %56 = vector.broadcast %cst_21 : f32 to vector<8x32xf32>
    %57 = arith.mulf %56, %55 : vector<8x32xf32>
    %cst_22 = arith.constant 5.000000e-01 : f32
    %58 = vector.broadcast %cst_22 : f32 to vector<8x32xf32>
    %59 = arith.addf %57, %58 : vector<8x32xf32>
    %60 = arith.mulf %53, %36 : vector<8x32xf32>
    %61 = arith.mulf %48, %54 : vector<8x32xf32>
    %62 = arith.addf %60, %61 : vector<8x32xf32>
    %63 = math.tanh %62 : vector<8x32xf32>
    %64 = arith.mulf %59, %63 : vector<8x32xf32>
    %65 = vector.extract_strided_slice %9 {offsets = [2, 0, 0], sizes = [1, 8, 128], strides = [1, 1, 1]} : vector<8x8x128xf32> to vector<1x8x128xf32>
    %66 = vector.shape_cast %65 : vector<1x8x128xf32> to vector<8x128xf32>
    %cst_23 = arith.constant dense<0.000000e+00> : vector<8x128xf32>
    %67 = tpu.matmul %64, %10, %cst_23 {dimension_numbers = #tpu.dot_dimension_numbers<[1], [0], [0], [1], [0, 0, 1, 1], [], []>} : vector<8x32xf32>, vector<32x128xf32>, vector<8x128xf32> -> vector<8x128xf32>
    %68 = arith.addf %66, %67 : vector<8x128xf32>
    %69 = math.tanh %68 : vector<8x128xf32>
    %70 = vector.extract_strided_slice %69 {offsets = [0, 0], sizes = [8, 32], strides = [1, 1]} : vector<8x128xf32> to vector<8x32xf32>
    %cst_24 = arith.constant 5.000000e-01 : f32
    %71 = vector.broadcast %cst_24 : f32 to vector<8x32xf32>
    %72 = arith.mulf %71, %70 : vector<8x32xf32>
    %cst_25 = arith.constant 5.000000e-01 : f32
    %73 = vector.broadcast %cst_25 : f32 to vector<8x32xf32>
    %74 = arith.addf %72, %73 : vector<8x32xf32>
    %75 = vector.extract_strided_slice %69 {offsets = [0, 32], sizes = [8, 32], strides = [1, 1]} : vector<8x128xf32> to vector<8x32xf32>
    %cst_26 = arith.constant 5.000000e-01 : f32
    %76 = vector.broadcast %cst_26 : f32 to vector<8x32xf32>
    %77 = arith.mulf %76, %75 : vector<8x32xf32>
    %cst_27 = arith.constant 5.000000e-01 : f32
    %78 = vector.broadcast %cst_27 : f32 to vector<8x32xf32>
    %79 = arith.addf %77, %78 : vector<8x32xf32>
    %80 = vector.extract_strided_slice %69 {offsets = [0, 64], sizes = [8, 32], strides = [1, 1]} : vector<8x128xf32> to vector<8x32xf32>
    %81 = vector.extract_strided_slice %69 {offsets = [0, 96], sizes = [8, 32], strides = [1, 1]} : vector<8x128xf32> to vector<8x32xf32>
    %cst_28 = arith.constant 5.000000e-01 : f32
    %82 = vector.broadcast %cst_28 : f32 to vector<8x32xf32>
    %83 = arith.mulf %82, %81 : vector<8x32xf32>
    %cst_29 = arith.constant 5.000000e-01 : f32
    %84 = vector.broadcast %cst_29 : f32 to vector<8x32xf32>
    %85 = arith.addf %83, %84 : vector<8x32xf32>
    %86 = arith.mulf %79, %62 : vector<8x32xf32>
    %87 = arith.mulf %74, %80 : vector<8x32xf32>
    %88 = arith.addf %86, %87 : vector<8x32xf32>
    %89 = math.tanh %88 : vector<8x32xf32>
    %90 = arith.mulf %85, %89 : vector<8x32xf32>
    %91 = vector.extract_strided_slice %9 {offsets = [3, 0, 0], sizes = [1, 8, 128], strides = [1, 1, 1]} : vector<8x8x128xf32> to vector<1x8x128xf32>
    %92 = vector.shape_cast %91 : vector<1x8x128xf32> to vector<8x128xf32>
    %cst_30 = arith.constant dense<0.000000e+00> : vector<8x128xf32>
    %93 = tpu.matmul %90, %10, %cst_30 {dimension_numbers = #tpu.dot_dimension_numbers<[1], [0], [0], [1], [0, 0, 1, 1], [], []>} : vector<8x32xf32>, vector<32x128xf32>, vector<8x128xf32> -> vector<8x128xf32>
    %94 = arith.addf %92, %93 : vector<8x128xf32>
    %95 = math.tanh %94 : vector<8x128xf32>
    %96 = vector.extract_strided_slice %95 {offsets = [0, 0], sizes = [8, 32], strides = [1, 1]} : vector<8x128xf32> to vector<8x32xf32>
    %cst_31 = arith.constant 5.000000e-01 : f32
    %97 = vector.broadcast %cst_31 : f32 to vector<8x32xf32>
    %98 = arith.mulf %97, %96 : vector<8x32xf32>
    %cst_32 = arith.constant 5.000000e-01 : f32
    %99 = vector.broadcast %cst_32 : f32 to vector<8x32xf32>
    %100 = arith.addf %98, %99 : vector<8x32xf32>
    %101 = vector.extract_strided_slice %95 {offsets = [0, 32], sizes = [8, 32], strides = [1, 1]} : vector<8x128xf32> to vector<8x32xf32>
    %cst_33 = arith.constant 5.000000e-01 : f32
    %102 = vector.broadcast %cst_33 : f32 to vector<8x32xf32>
    %103 = arith.mulf %102, %101 : vector<8x32xf32>
    %cst_34 = arith.constant 5.000000e-01 : f32
    %104 = vector.broadcast %cst_34 : f32 to vector<8x32xf32>
    %105 = arith.addf %103, %104 : vector<8x32xf32>
    %106 = vector.extract_strided_slice %95 {offsets = [0, 64], sizes = [8, 32], strides = [1, 1]} : vector<8x128xf32> to vector<8x32xf32>
    %107 = vector.extract_strided_slice %95 {offsets = [0, 96], sizes = [8, 32], strides = [1, 1]} : vector<8x128xf32> to vector<8x32xf32>
    %cst_35 = arith.constant 5.000000e-01 : f32
    %108 = vector.broadcast %cst_35 : f32 to vector<8x32xf32>
    %109 = arith.mulf %108, %107 : vector<8x32xf32>
    %cst_36 = arith.constant 5.000000e-01 : f32
    %110 = vector.broadcast %cst_36 : f32 to vector<8x32xf32>
    %111 = arith.addf %109, %110 : vector<8x32xf32>
    %112 = arith.mulf %105, %88 : vector<8x32xf32>
    %113 = arith.mulf %100, %106 : vector<8x32xf32>
    %114 = arith.addf %112, %113 : vector<8x32xf32>
    %115 = math.tanh %114 : vector<8x32xf32>
    %116 = arith.mulf %111, %115 : vector<8x32xf32>
    %117 = vector.extract_strided_slice %9 {offsets = [4, 0, 0], sizes = [1, 8, 128], strides = [1, 1, 1]} : vector<8x8x128xf32> to vector<1x8x128xf32>
    %118 = vector.shape_cast %117 : vector<1x8x128xf32> to vector<8x128xf32>
    %cst_37 = arith.constant dense<0.000000e+00> : vector<8x128xf32>
    %119 = tpu.matmul %116, %10, %cst_37 {dimension_numbers = #tpu.dot_dimension_numbers<[1], [0], [0], [1], [0, 0, 1, 1], [], []>} : vector<8x32xf32>, vector<32x128xf32>, vector<8x128xf32> -> vector<8x128xf32>
    %120 = arith.addf %118, %119 : vector<8x128xf32>
    %121 = math.tanh %120 : vector<8x128xf32>
    %122 = vector.extract_strided_slice %121 {offsets = [0, 0], sizes = [8, 32], strides = [1, 1]} : vector<8x128xf32> to vector<8x32xf32>
    %cst_38 = arith.constant 5.000000e-01 : f32
    %123 = vector.broadcast %cst_38 : f32 to vector<8x32xf32>
    %124 = arith.mulf %123, %122 : vector<8x32xf32>
    %cst_39 = arith.constant 5.000000e-01 : f32
    %125 = vector.broadcast %cst_39 : f32 to vector<8x32xf32>
    %126 = arith.addf %124, %125 : vector<8x32xf32>
    %127 = vector.extract_strided_slice %121 {offsets = [0, 32], sizes = [8, 32], strides = [1, 1]} : vector<8x128xf32> to vector<8x32xf32>
    %cst_40 = arith.constant 5.000000e-01 : f32
    %128 = vector.broadcast %cst_40 : f32 to vector<8x32xf32>
    %129 = arith.mulf %128, %127 : vector<8x32xf32>
    %cst_41 = arith.constant 5.000000e-01 : f32
    %130 = vector.broadcast %cst_41 : f32 to vector<8x32xf32>
    %131 = arith.addf %129, %130 : vector<8x32xf32>
    %132 = vector.extract_strided_slice %121 {offsets = [0, 64], sizes = [8, 32], strides = [1, 1]} : vector<8x128xf32> to vector<8x32xf32>
    %133 = vector.extract_strided_slice %121 {offsets = [0, 96], sizes = [8, 32], strides = [1, 1]} : vector<8x128xf32> to vector<8x32xf32>
    %cst_42 = arith.constant 5.000000e-01 : f32
    %134 = vector.broadcast %cst_42 : f32 to vector<8x32xf32>
    %135 = arith.mulf %134, %133 : vector<8x32xf32>
    %cst_43 = arith.constant 5.000000e-01 : f32
    %136 = vector.broadcast %cst_43 : f32 to vector<8x32xf32>
    %137 = arith.addf %135, %136 : vector<8x32xf32>
    %138 = arith.mulf %131, %114 : vector<8x32xf32>
    %139 = arith.mulf %126, %132 : vector<8x32xf32>
    %140 = arith.addf %138, %139 : vector<8x32xf32>
    %141 = math.tanh %140 : vector<8x32xf32>
    %142 = arith.mulf %137, %141 : vector<8x32xf32>
    %143 = vector.extract_strided_slice %9 {offsets = [5, 0, 0], sizes = [1, 8, 128], strides = [1, 1, 1]} : vector<8x8x128xf32> to vector<1x8x128xf32>
    %144 = vector.shape_cast %143 : vector<1x8x128xf32> to vector<8x128xf32>
    %cst_44 = arith.constant dense<0.000000e+00> : vector<8x128xf32>
    %145 = tpu.matmul %142, %10, %cst_44 {dimension_numbers = #tpu.dot_dimension_numbers<[1], [0], [0], [1], [0, 0, 1, 1], [], []>} : vector<8x32xf32>, vector<32x128xf32>, vector<8x128xf32> -> vector<8x128xf32>
    %146 = arith.addf %144, %145 : vector<8x128xf32>
    %147 = math.tanh %146 : vector<8x128xf32>
    %148 = vector.extract_strided_slice %147 {offsets = [0, 0], sizes = [8, 32], strides = [1, 1]} : vector<8x128xf32> to vector<8x32xf32>
    %cst_45 = arith.constant 5.000000e-01 : f32
    %149 = vector.broadcast %cst_45 : f32 to vector<8x32xf32>
    %150 = arith.mulf %149, %148 : vector<8x32xf32>
    %cst_46 = arith.constant 5.000000e-01 : f32
    %151 = vector.broadcast %cst_46 : f32 to vector<8x32xf32>
    %152 = arith.addf %150, %151 : vector<8x32xf32>
    %153 = vector.extract_strided_slice %147 {offsets = [0, 32], sizes = [8, 32], strides = [1, 1]} : vector<8x128xf32> to vector<8x32xf32>
    %cst_47 = arith.constant 5.000000e-01 : f32
    %154 = vector.broadcast %cst_47 : f32 to vector<8x32xf32>
    %155 = arith.mulf %154, %153 : vector<8x32xf32>
    %cst_48 = arith.constant 5.000000e-01 : f32
    %156 = vector.broadcast %cst_48 : f32 to vector<8x32xf32>
    %157 = arith.addf %155, %156 : vector<8x32xf32>
    %158 = vector.extract_strided_slice %147 {offsets = [0, 64], sizes = [8, 32], strides = [1, 1]} : vector<8x128xf32> to vector<8x32xf32>
    %159 = vector.extract_strided_slice %147 {offsets = [0, 96], sizes = [8, 32], strides = [1, 1]} : vector<8x128xf32> to vector<8x32xf32>
    %cst_49 = arith.constant 5.000000e-01 : f32
    %160 = vector.broadcast %cst_49 : f32 to vector<8x32xf32>
    %161 = arith.mulf %160, %159 : vector<8x32xf32>
    %cst_50 = arith.constant 5.000000e-01 : f32
    %162 = vector.broadcast %cst_50 : f32 to vector<8x32xf32>
    %163 = arith.addf %161, %162 : vector<8x32xf32>
    %164 = arith.mulf %157, %140 : vector<8x32xf32>
    %165 = arith.mulf %152, %158 : vector<8x32xf32>
    %166 = arith.addf %164, %165 : vector<8x32xf32>
    %167 = math.tanh %166 : vector<8x32xf32>
    %168 = arith.mulf %163, %167 : vector<8x32xf32>
    %169 = vector.extract_strided_slice %9 {offsets = [6, 0, 0], sizes = [1, 8, 128], strides = [1, 1, 1]} : vector<8x8x128xf32> to vector<1x8x128xf32>
    %170 = vector.shape_cast %169 : vector<1x8x128xf32> to vector<8x128xf32>
    %cst_51 = arith.constant dense<0.000000e+00> : vector<8x128xf32>
    %171 = tpu.matmul %168, %10, %cst_51 {dimension_numbers = #tpu.dot_dimension_numbers<[1], [0], [0], [1], [0, 0, 1, 1], [], []>} : vector<8x32xf32>, vector<32x128xf32>, vector<8x128xf32> -> vector<8x128xf32>
    %172 = arith.addf %170, %171 : vector<8x128xf32>
    %173 = math.tanh %172 : vector<8x128xf32>
    %174 = vector.extract_strided_slice %173 {offsets = [0, 0], sizes = [8, 32], strides = [1, 1]} : vector<8x128xf32> to vector<8x32xf32>
    %cst_52 = arith.constant 5.000000e-01 : f32
    %175 = vector.broadcast %cst_52 : f32 to vector<8x32xf32>
    %176 = arith.mulf %175, %174 : vector<8x32xf32>
    %cst_53 = arith.constant 5.000000e-01 : f32
    %177 = vector.broadcast %cst_53 : f32 to vector<8x32xf32>
    %178 = arith.addf %176, %177 : vector<8x32xf32>
    %179 = vector.extract_strided_slice %173 {offsets = [0, 32], sizes = [8, 32], strides = [1, 1]} : vector<8x128xf32> to vector<8x32xf32>
    %cst_54 = arith.constant 5.000000e-01 : f32
    %180 = vector.broadcast %cst_54 : f32 to vector<8x32xf32>
    %181 = arith.mulf %180, %179 : vector<8x32xf32>
    %cst_55 = arith.constant 5.000000e-01 : f32
    %182 = vector.broadcast %cst_55 : f32 to vector<8x32xf32>
    %183 = arith.addf %181, %182 : vector<8x32xf32>
    %184 = vector.extract_strided_slice %173 {offsets = [0, 64], sizes = [8, 32], strides = [1, 1]} : vector<8x128xf32> to vector<8x32xf32>
    %185 = vector.extract_strided_slice %173 {offsets = [0, 96], sizes = [8, 32], strides = [1, 1]} : vector<8x128xf32> to vector<8x32xf32>
    %cst_56 = arith.constant 5.000000e-01 : f32
    %186 = vector.broadcast %cst_56 : f32 to vector<8x32xf32>
    %187 = arith.mulf %186, %185 : vector<8x32xf32>
    %cst_57 = arith.constant 5.000000e-01 : f32
    %188 = vector.broadcast %cst_57 : f32 to vector<8x32xf32>
    %189 = arith.addf %187, %188 : vector<8x32xf32>
    %190 = arith.mulf %183, %166 : vector<8x32xf32>
    %191 = arith.mulf %178, %184 : vector<8x32xf32>
    %192 = arith.addf %190, %191 : vector<8x32xf32>
    %193 = math.tanh %192 : vector<8x32xf32>
    %194 = arith.mulf %189, %193 : vector<8x32xf32>
    %195 = vector.extract_strided_slice %9 {offsets = [7, 0, 0], sizes = [1, 8, 128], strides = [1, 1, 1]} : vector<8x8x128xf32> to vector<1x8x128xf32>
    %196 = vector.shape_cast %195 : vector<1x8x128xf32> to vector<8x128xf32>
    %cst_58 = arith.constant dense<0.000000e+00> : vector<8x128xf32>
    %197 = tpu.matmul %194, %10, %cst_58 {dimension_numbers = #tpu.dot_dimension_numbers<[1], [0], [0], [1], [0, 0, 1, 1], [], []>} : vector<8x32xf32>, vector<32x128xf32>, vector<8x128xf32> -> vector<8x128xf32>
    %198 = arith.addf %196, %197 : vector<8x128xf32>
    %199 = math.tanh %198 : vector<8x128xf32>
    %200 = vector.extract_strided_slice %199 {offsets = [0, 0], sizes = [8, 32], strides = [1, 1]} : vector<8x128xf32> to vector<8x32xf32>
    %cst_59 = arith.constant 5.000000e-01 : f32
    %201 = vector.broadcast %cst_59 : f32 to vector<8x32xf32>
    %202 = arith.mulf %201, %200 : vector<8x32xf32>
    %cst_60 = arith.constant 5.000000e-01 : f32
    %203 = vector.broadcast %cst_60 : f32 to vector<8x32xf32>
    %204 = arith.addf %202, %203 : vector<8x32xf32>
    %205 = vector.extract_strided_slice %199 {offsets = [0, 32], sizes = [8, 32], strides = [1, 1]} : vector<8x128xf32> to vector<8x32xf32>
    %cst_61 = arith.constant 5.000000e-01 : f32
    %206 = vector.broadcast %cst_61 : f32 to vector<8x32xf32>
    %207 = arith.mulf %206, %205 : vector<8x32xf32>
    %cst_62 = arith.constant 5.000000e-01 : f32
    %208 = vector.broadcast %cst_62 : f32 to vector<8x32xf32>
    %209 = arith.addf %207, %208 : vector<8x32xf32>
    %210 = vector.extract_strided_slice %199 {offsets = [0, 64], sizes = [8, 32], strides = [1, 1]} : vector<8x128xf32> to vector<8x32xf32>
    %211 = vector.extract_strided_slice %199 {offsets = [0, 96], sizes = [8, 32], strides = [1, 1]} : vector<8x128xf32> to vector<8x32xf32>
    %cst_63 = arith.constant 5.000000e-01 : f32
    %212 = vector.broadcast %cst_63 : f32 to vector<8x32xf32>
    %213 = arith.mulf %212, %211 : vector<8x32xf32>
    %cst_64 = arith.constant 5.000000e-01 : f32
    %214 = vector.broadcast %cst_64 : f32 to vector<8x32xf32>
    %215 = arith.addf %213, %214 : vector<8x32xf32>
    %216 = arith.mulf %209, %192 : vector<8x32xf32>
    %217 = arith.mulf %204, %210 : vector<8x32xf32>
    %218 = arith.addf %216, %217 : vector<8x32xf32>
    %219 = math.tanh %218 : vector<8x32xf32>
    %220 = arith.mulf %215, %219 : vector<8x32xf32>
    %c0_65 = arith.constant 0 : index
    %c0_66 = arith.constant 0 : index
    %221 = vector.load %arg5[%c0_65, %c0_66] : memref<1x32xf32, #tpu.memory_space<vmem>>, vector<1x32xf32>
    %222 = vector.broadcast %221 : vector<1x32xf32> to vector<8x32xf32>
    %223 = arith.mulf %220, %222 : vector<8x32xf32>
    %cst_67 = arith.constant dense<0.000000e+00> : vector<8xf32>
    %224 = vector.multi_reduction <add>, %223, %cst_67 [1] : vector<8x32xf32> to vector<8xf32>
    %225 = vector.shape_cast %224 : vector<8xf32> to vector<8x1xf32>
    %c0_68 = arith.constant 0 : index
    %c0_69 = arith.constant 0 : index
    %226 = vector.load %arg6[%c0_68, %c0_69] : memref<1x1xf32, #tpu.memory_space<vmem>>, vector<1x1xf32>
    %227 = vector.broadcast %226 : vector<1x1xf32> to vector<8x1xf32>
    %228 = arith.addf %225, %227 : vector<8x1xf32>
    %c0_70 = arith.constant 0 : index
    %c0_71 = arith.constant 0 : index
    %229 = vector.load %arg7[%c0_70, %c0_71] : memref<8x1xf32, #tpu.memory_space<vmem>>, vector<8x1xf32>
    tpu.vector_store %arg7[%c0_70, %c0_71], %228 {strides = array<i32>} : memref<8x1xf32, #tpu.memory_space<vmem>>, vector<8x1xf32>,
    return
  }
  func.func @transform_0(%arg0: i32) -> (i32, i32, i32) {
    %c0_i32 = arith.constant 0 : i32
    %c0_i32_0 = arith.constant 0 : i32
    %c0_i32_1 = arith.constant 0 : i32
    return %c0_i32, %arg0, %c0_i32_0 : i32, i32, i32
  }
  func.func @transform_1(%arg0: i32) -> (i32, i32) {
    %c0_i32 = arith.constant 0 : i32
    %c0_i32_0 = arith.constant 0 : i32
    %c0_i32_1 = arith.constant 0 : i32
    return %c0_i32, %c0_i32_0 : i32, i32
  }
  func.func @transform_2(%arg0: i32) -> (i32, i32) {
    %c0_i32 = arith.constant 0 : i32
    %c0_i32_0 = arith.constant 0 : i32
    %c0_i32_1 = arith.constant 0 : i32
    return %c0_i32, %c0_i32_0 : i32, i32
  }
  func.func @transform_3(%arg0: i32) -> (i32, i32) {
    %c0_i32 = arith.constant 0 : i32
    %c0_i32_0 = arith.constant 0 : i32
    %c0_i32_1 = arith.constant 0 : i32
    return %c0_i32, %c0_i32_0 : i32, i32
  }
  func.func @transform_4(%arg0: i32) -> (i32, i32) {
    %c0_i32 = arith.constant 0 : i32
    %c0_i32_0 = arith.constant 0 : i32
    %c0_i32_1 = arith.constant 0 : i32
    return %c0_i32, %c0_i32_0 : i32, i32
  }
  func.func @transform_5(%arg0: i32) -> (i32, i32) {
    %c0_i32 = arith.constant 0 : i32
    %c0_i32_0 = arith.constant 0 : i32
    %c0_i32_1 = arith.constant 0 : i32
    return %c0_i32, %c0_i32_0 : i32, i32
  }
  func.func @transform_6(%arg0: i32) -> (i32, i32) {
    %c0_i32 = arith.constant 0 : i32
    %c0_i32_0 = arith.constant 0 : i32
    return %arg0, %c0_i32 : i32, i32
  }
}

</mosaic_0001>

<llo_original>
// kernel: tpu_custom_call.1
$region0: #{tpu_custom_call.1}
  #allocation0 [shape = 'u32[]', space=smem, size = 0x4, offset = 0x4, fixed_abs, tag = 'smem constant byte address 0x4 - core index']
  #allocation1 [shape = 'u32[144,128]{1,0:T(1,128)}', space=vmem, size = 0x12000, scoped, tag = 'internal scratch']
  #allocation2 [shape = 'f32[1,1]{1,0:T(1,128)S(1)}', space=vmem, size = 0x200, scoped, tag = 'scoped memory for tpu_custom_call.1']
  %s0 = inlined_call_operand.vmem [shape: f32[8,16,1], index: 0, kind: input, shape index: {}]
  %s1 = inlined_call_operand.vmem [shape: f32[1,128], index: 1, kind: input, shape index: {}]
  %s2 = inlined_call_operand.vmem [shape: f32[32,128], index: 2, kind: input, shape index: {}]
  %s3 = inlined_call_operand.vmem [shape: f32[1,128], index: 3, kind: input, shape index: {}]
  %s4 = inlined_call_operand.vmem [shape: f32[1,32], index: 4, kind: input, shape index: {}]
  %s5 = inlined_call_operand.<no memory space> [shape: f32[1,1], index: 5, kind: input, shape index: {}]
  %s6 = inlined_call_operand.vmem [shape: f32[16,1], index: 6, kind: output, shape index: {}]
  %s7 = sld [smem:[#allocation0]]
  $region95: #{tpu_custom_call.1} parent=0
    _
  %s9 = ssub.s32 1, %s7
  %s10 = scalar_select 0, %s9, %s7
  %v11 = vstv %s5
  %12 = vst [vmem:[#allocation2] sm:$0x1] %v11
  $region1: #{tpu_custom_call.1} parent=0
    #allocation3 [shape = 'u8[65536]{0}', space=vmem, size = 0x10000, scoped, tag = 'input window, operand 0']
    loop: start=0, step=1, limit=4
    $region2: #{tpu_custom_call.1} parent=1 // loop_pre_header
      _
    $region3: #{tpu_custom_call.1} parent=1 // loop_header
      %s14 = sphi 0, %s18
      %p15 = scmp.ge.s32.totalorder %s14, 4
      %s24 = sphi 0, %s26
      %s27 = sphi 0, %s24
      %s28 = sphi 0, %s27
      %s44 = sphi 0, %s28
      %s48 = sphi 0, %s48
      %s50 = sphi 0, %s48
      %s51 = sphi 0, %s50
      %s65 = sphi 0, %s51
      %s69 = sphi 0, %s69
      %s71 = sphi 0, %s69
      %s72 = sphi 0, %s71
      %s86 = sphi 0, %s72
      %s90 = sphi 0, %s90
      %s92 = sphi 0, %s90
      %s93 = sphi 0, %s92
      %s107 = sphi 0, %s93
      %s111 = sphi 0, %s111
      %s113 = sphi 0, %s111
      %s114 = sphi 0, %s113
      %s128 = sphi 0, %s114
      %s132 = sphi 0, %s132
      %s134 = sphi 0, %s132
      %s135 = sphi 0, %s134
      %s149 = sphi 0, %s135
      %s155 = sphi 0, %s157
      %s158 = sphi 0, %s155
      %s159 = sphi 0, %s158
      %s175 = sphi 0, %s159
    $region4: #{tpu_custom_call.1} parent=1 // loop_header_branch
      %17 = sbr.rel (%p15) target = $region8
    $region5: #{tpu_custom_call.1} parent=1 // loop_body
      %s19 = ssub.s32 %s14, 1
      %s20 = ssub.s32 %s14, 2
      %s21 = sadd.s32 %s14, 1
      %s22 = ssub.s32 %s14, %s21
      %p23 = scmp.eq.s32.totalorder %s22, 0
      %s25 = sadd.s32 %s24, 1
      %s26 = scalar_select %p23, %s24, %s25
      %p29 = pneg %p23
      %p30 = scmp.eq.s32.totalorder %s14, 1
      %p31 = por %p29, %p30
      %p32 = scmp.ne.s32.totalorder %s24, %s27
      %p33 = scmp.eq.s32.totalorder %s14, 0
      %p34 = por %p32, %p33
      %p35 = scmp.ne.s32.totalorder %s24, %s27
      %p36 = scmp.eq.s32.totalorder %s19, 1
      %p37 = por %p35, %p36
      %p38 = scmp.ne.s32.totalorder %s27, %s28
      %p39 = scmp.eq.s32.totalorder %s19, 0
      %p40 = por %p38, %p39
      %p41 = scmp.ne.s32.totalorder %s27, %s28
      %p42 = scmp.eq.s32.totalorder %s20, 1
      %p43 = por %p41, %p42
      %p45 = scmp.ne.s32.totalorder %s28, %s44
      %p46 = scmp.eq.s32.totalorder %s20, 0
      %p47 = por %p45, %p46
      %s49 = sadd.s32 %s48, 1
      %p52 = scmp.eq.s32.totalorder %s14, 1
      %p53 = scmp.ne.s32.totalorder %s48, %s50
      %p54 = scmp.eq.s32.totalorder %s14, 0
      %p55 = por %p53, %p54
      %p56 = scmp.ne.s32.totalorder %s48, %s50
      %p57 = scmp.eq.s32.totalorder %s19, 1
      %p58 = por %p56, %p57
      %p59 = scmp.ne.s32.totalorder %s50, %s51
      %p60 = scmp.eq.s32.totalorder %s19, 0
      %p61 = por %p59, %p60
      %p62 = scmp.ne.s32.totalorder %s50, %s51
      %p63 = scmp.eq.s32.totalorder %s20, 1
      %p64 = por %p62, %p63
      %p66 = scmp.ne.s32.totalorder %s51, %s65
      %p67 = scmp.eq.s32.totalorder %s20, 0
      %p68 = por %p66, %p67
      %s70 = sadd.s32 %s69, 1
      %p73 = scmp.eq.s32.totalorder %s14, 1
      %p74 = scmp.ne.s32.totalorder %s69, %s71
      %p75 = scmp.eq.s32.totalorder %s14, 0
      %p76 = por %p74, %p75
      %p77 = scmp.ne.s32.totalorder %s69, %s71
      %p78 = scmp.eq.s32.totalorder %s19, 1
      %p79 = por %p77, %p78
      %p80 = scmp.ne.s32.totalorder %s71, %s72
      %p81 = scmp.eq.s32.totalorder %s19, 0
      %p82 = por %p80, %p81
      %p83 = scmp.ne.s32.totalorder %s71, %s72
      %p84 = scmp.eq.s32.totalorder %s20, 1
      %p85 = por %p83, %p84
      %p87 = scmp.ne.s32.totalorder %s72, %s86
      %p88 = scmp.eq.s32.totalorder %s20, 0
      %p89 = por %p87, %p88
      %s91 = sadd.s32 %s90, 1
      %p94 = scmp.eq.s32.totalorder %s14, 1
      %p95 = scmp.ne.s32.totalorder %s90, %s92
      %p96 = scmp.eq.s32.totalorder %s14, 0
      %p97 = por %p95, %p96
      %p98 = scmp.ne.s32.totalorder %s90, %s92
      %p99 = scmp.eq.s32.totalorder %s19, 1
      %p100 = por %p98, %p99
      %p101 = scmp.ne.s32.totalorder %s92, %s93
      %p102 = scmp.eq.s32.totalorder %s19, 0
      %p103 = por %p101, %p102
      %p104 = scmp.ne.s32.totalorder %s92, %s93
      %p105 = scmp.eq.s32.totalorder %s20, 1
      %p106 = por %p104, %p105
      %p108 = scmp.ne.s32.totalorder %s93, %s107
      %p109 = scmp.eq.s32.totalorder %s20, 0
      %p110 = por %p108, %p109
      %s112 = sadd.s32 %s111, 1
      %p115 = scmp.eq.s32.totalorder %s14, 1
      %p116 = scmp.ne.s32.totalorder %s111, %s113
      %p117 = scmp.eq.s32.totalorder %s14, 0
      %p118 = por %p116, %p117
      %p119 = scmp.ne.s32.totalorder %s111, %s113
      %p120 = scmp.eq.s32.totalorder %s19, 1
      %p121 = por %p119, %p120
      %p122 = scmp.ne.s32.totalorder %s113, %s114
      %p123 = scmp.eq.s32.totalorder %s19, 0
      %p124 = por %p122, %p123
      %p125 = scmp.ne.s32.totalorder %s113, %s114
      %p126 = scmp.eq.s32.totalorder %s20, 1
      %p127 = por %p125, %p126
      %p129 = scmp.ne.s32.totalorder %s114, %s128
      %p130 = scmp.eq.s32.totalorder %s20, 0
      %p131 = por %p129, %p130
      %s133 = sadd.s32 %s132, 1
      %p136 = scmp.eq.s32.totalorder %s14, 1
      %p137 = scmp.ne.s32.totalorder %s132, %s134
      %p138 = scmp.eq.s32.totalorder %s14, 0
      %p139 = por %p137, %p138
      %p140 = scmp.ne.s32.totalorder %s132, %s134
      %p141 = scmp.eq.s32.totalorder %s19, 1
      %p142 = por %p140, %p141
      %p143 = scmp.ne.s32.totalorder %s134, %s135
      %p144 = scmp.eq.s32.totalorder %s19, 0
      %p145 = por %p143, %p144
      %p146 = scmp.ne.s32.totalorder %s134, %s135
      %p147 = scmp.eq.s32.totalorder %s20, 1
      %p148 = por %p146, %p147
      %p150 = scmp.ne.s32.totalorder %s135, %s149
      %p151 = scmp.eq.s32.totalorder %s20, 0
      %p152 = por %p150, %p151
      %s153 = ssub.s32 %s14, %s21
      %p154 = scmp.eq.s32.totalorder %s153, 0
      %s156 = sadd.s32 %s155, 1
      %s157 = scalar_select %p154, %s155, %s156
      %p160 = pneg %p154
      %p161 = scmp.eq.s32.totalorder %s14, 1
      %p162 = por %p160, %p161
      %p163 = scmp.ne.s32.totalorder %s155, %s158
      %p164 = scmp.eq.s32.totalorder %s14, 0
      %p165 = por %p163, %p164
      %p166 = scmp.ne.s32.totalorder %s155, %s158
      %p167 = scmp.eq.s32.totalorder %s19, 1
      %p168 = por %p166, %p167
      %p169 = scmp.ne.s32.totalorder %s158, %s159
      %p170 = scmp.eq.s32.totalorder %s19, 0
      %p171 = por %p169, %p170
      %p172 = scmp.ne.s32.totalorder %s158, %s159
      %p173 = scmp.eq.s32.totalorder %s20, 1
      %p174 = por %p172, %p173
      %p176 = scmp.ne.s32.totalorder %s159, %s175
      %p177 = scmp.eq.s32.totalorder %s20, 0
      %p178 = por %p176, %p177
      %p179 = scmp.le.s32.totalorder 1, %s14
      %p180 = scmp.lt.s32.totalorder %s14, 3
      %p181 = pnand %p179, %p180
      %p182 = pneg %p181
      // Predicated region
      $region9: #{tpu_custom_call.1} parent=5 // pred_check
        _
      $region10: #{tpu_custom_call.1} parent=5 // pred_check_branch
        %184 = sbr.rel (%p181) target = $region12
      $region11: #{tpu_custom_call.1} parent=5 // pred_region
        %s185 = ssub.s32 %s14, 1
        // Predicated region
        $region13: #{tpu_custom_call.1} parent=11 // pred_check
          %p186 = pneg %p61
        $region14: #{tpu_custom_call.1} parent=11 // pred_check_branch
          %188 = sbr.rel (%p186) target = $region16
        $region15: #{tpu_custom_call.1} parent=11 // pred_region
          _
        $region16: #{tpu_custom_call.1} parent=11 // pred_fallthru
          _
        // Predicated region
        $region17: #{tpu_custom_call.1} parent=11 // pred_check
          %p189 = pneg %p82
        $region18: #{tpu_custom_call.1} parent=11 // pred_check_branch
          %191 = sbr.rel (%p189) target = $region20
        $region19: #{tpu_custom_call.1} parent=11 // pred_region
          _
        $region20: #{tpu_custom_call.1} parent=11 // pred_fallthru
          _
        // Predicated region
        $region21: #{tpu_custom_call.1} parent=11 // pred_check
          %p192 = pneg %p103
        $region22: #{tpu_custom_call.1} parent=11 // pred_check_branch
          %194 = sbr.rel (%p192) target = $region24
        $region23: #{tpu_custom_call.1} parent=11 // pred_region
          _
        $region24: #{tpu_custom_call.1} parent=11 // pred_fallthru
          _
        // Predicated region
        $region25: #{tpu_custom_call.1} parent=11 // pred_check
          %p195 = pneg %p124
        $region26: #{tpu_custom_call.1} parent=11 // pred_check_branch
          %197 = sbr.rel (%p195) target = $region28
        $region27: #{tpu_custom_call.1} parent=11 // pred_region
          _
        $region28: #{tpu_custom_call.1} parent=11 // pred_fallthru
          _
        // Predicated region
        $region29: #{tpu_custom_call.1} parent=11 // pred_check
          %p198 = pneg %p145
        $region30: #{tpu_custom_call.1} parent=11 // pred_check_branch
          %200 = sbr.rel (%p198) target = $region32
        $region31: #{tpu_custom_call.1} parent=11 // pred_region
          _
        $region32: #{tpu_custom_call.1} parent=11 // pred_fallthru
          _
      $region12: #{tpu_custom_call.1} parent=5 // pred_fallthru
        _
      %p201 = scmp.lt.s32.totalorder %s14, 2
      // Predicated region
      $region33: #{tpu_custom_call.1} parent=5 // pred_check
        %p202 = pneg %p201
      $region34: #{tpu_custom_call.1} parent=5 // pred_check_branch
        %204 = sbr.rel (%p202) target = $region36
      $region35: #{tpu_custom_call.1} parent=5 // pred_region
        // Predicated region
        $region37: #{tpu_custom_call.1} parent=35 // pred_check
          %p205 = pneg %p34
        $region38: #{tpu_custom_call.1} parent=35 // pred_check_branch
          %207 = sbr.rel (%p205) target = $region40
        $region39: #{tpu_custom_call.1} parent=35 // pred_region
          %s208 = sand.u32 %s24, 1
          %s209 = sand.u32 %s24, 1
          %s210 = smul.addr %s209, 64
          %s211 = scalar_lea.vmem [#allocation3], %s210
          %s212 = smul.addr %s14, 8
          %s213 = scalar_lea.vmem %s0, %s212
          // Predicated region
          $region41: #{tpu_custom_call.1} parent=39 // pred_check
            _
          $region42: #{tpu_custom_call.1} parent=39 // pred_check_branch
            %215 = sbr.rel (0) target = $region44
          $region43: #{tpu_custom_call.1} parent=39 // pred_region
            // Predicated region
            $region45: #{tpu_custom_call.1} parent=43 // pred_check
              _
            $region46: #{tpu_custom_call.1} parent=43 // pred_check_branch
              %217 = sbr.rel (0) target = $region48
            $region47: #{tpu_custom_call.1} parent=43 // pred_region
              // Predicated region
              $region60: #{tpu_custom_call.1} parent=47 // pred_check
                _
              $region61: #{tpu_custom_call.1} parent=47 // pred_check_branch
                %246 = sbr.rel (0) target = $region63
              $region62: #{tpu_custom_call.1} parent=47 // pred_region
                loop: start=0, step=1, limit=1
                $region64: #{tpu_custom_call.1} parent=62 // loop_pre_header
                  _
                $region65: #{tpu_custom_call.1} parent=62 // loop_header
                  %s248 = sphi 0, %s252
                  %p249 = scmp.ge.s32.totalorder %s248, 1
                  %s253 = sphi %s213, %s213
                  %s254 = sphi %s211, %s211
                $region66: #{tpu_custom_call.1} parent=62 // loop_header_branch
                  %251 = sbr.rel (%p249) target = $region70
                $region67: #{tpu_custom_call.1} parent=62 // loop_body
                  %v255 = vld [vmem:[%s253] sm:$0xff]
                  %256 = vst [vmem:[%s254] sm:$0xff] %v255
                  %v257 = vld [vmem:[%s253 + $0x10] sm:$0xff]
                  %258 = vst [vmem:[%s254 + $0x8] sm:$0xff] %v257
                  %v259 = vld [vmem:[%s253 + $0x20] sm:$0xff]
                  %260 = vst [vmem:[%s254 + $0x10] sm:$0xff] %v259
                  %v261 = vld [vmem:[%s253 + $0x30] sm:$0xff]
                  %262 = vst [vmem:[%s254 + $0x18] sm:$0xff] %v261
                  %v263 = vld [vmem:[%s253 + $0x40] sm:$0xff]
                  %264 = vst [vmem:[%s254 + $0x20] sm:$0xff] %v263
                  %v265 = vld [vmem:[%s253 + $0x50] sm:$0xff]
                  %266 = vst [vmem:[%s254 + $0x28] sm:$0xff] %v265
                  %v267 = vld [vmem:[%s253 + $0x60] sm:$0xff]
                  %268 = vst [vmem:[%s254 + $0x30] sm:$0xff] %v267
                  %v269 = vld [vmem:[%s253 + $0x70] sm:$0xff]
                  %270 = vst [vmem:[%s254 + $0x38] sm:$0xff] %v269
                $region68: #{tpu_custom_call.1} parent=62 // loop_footer
                  %s252 = sadd.s32 1, %s248
                $region69: #{tpu_custom_call.1} parent=62 // loop_footer_branch
                  %247 = sbr.rel target = $region65
                $region70: #{tpu_custom_call.1} parent=62 // loop_exit
                  _
              $region63: #{tpu_custom_call.1} parent=47 // pred_fallthru
                _
              // Predicated region
              $region71: #{tpu_custom_call.1} parent=47 // pred_check
                _
              $region72: #{tpu_custom_call.1} parent=47 // pred_check_branch
                %272 = sbr.rel target = $region74
              $region73: #{tpu_custom_call.1} parent=47 // pred_region
                _
              $region74: #{tpu_custom_call.1} parent=47 // pred_fallthru
                _
            $region48: #{tpu_custom_call.1} parent=43 // pred_fallthru
              _
            // Predicated region
            $region49: #{tpu_custom_call.1} parent=43 // pred_check
              _
            $region50: #{tpu_custom_call.1} parent=43 // pred_check_branch
              %219 = sbr.rel target = $region52
            $region51: #{tpu_custom_call.1} parent=43 // pred_region
              loop: start=0, step=1, limit=1
              $region53: #{tpu_custom_call.1} parent=51 // loop_pre_header
                _
              $region54: #{tpu_custom_call.1} parent=51 // loop_header
                %s222 = sphi 0, %s226
                %p223 = scmp.ge.s32.totalorder %s222, 1
                %s227 = sphi %s213, %s213
                %s228 = sphi %s211, %s211
              $region55: #{tpu_custom_call.1} parent=51 // loop_header_branch
                %225 = sbr.rel (%p223) target = $region59
              $region56: #{tpu_custom_call.1} parent=51 // loop_body
                %v229 = vld [vmem:[%s227] sm:$0xff]
                %230 = vst [vmem:[%s228] sm:$0xff] %v229
                %v231 = vld [vmem:[%s227 + $0x10] sm:$0xff]
                %232 = vst [vmem:[%s228 + $0x8] sm:$0xff] %v231
                %v233 = vld [vmem:[%s227 + $0x20] sm:$0xff]
                %234 = vst [vmem:[%s228 + $0x10] sm:$0xff] %v233
                %v235 = vld [vmem:[%s227 + $0x30] sm:$0xff]
                %236 = vst [vmem:[%s228 + $0x18] sm:$0xff] %v235
                %v237 = vld [vmem:[%s227 + $0x40] sm:$0xff]
                %238 = vst [vmem:[%s228 + $0x20] sm:$0xff] %v237
                %v239 = vld [vmem:[%s227 + $0x50] sm:$0xff]
                %240 = vst [vmem:[%s228 + $0x28] sm:$0xff] %v239
                %v241 = vld [vmem:[%s227 + $0x60] sm:$0xff]
                %242 = vst [vmem:[%s228 + $0x30] sm:$0xff] %v241
                %v243 = vld [vmem:[%s227 + $0x70] sm:$0xff]
                %244 = vst [vmem:[%s228 + $0x38] sm:$0xff] %v243
              $region57: #{tpu_custom_call.1} parent=51 // loop_footer
                %s226 = sadd.s32 1, %s222
              $region58: #{tpu_custom_call.1} parent=51 // loop_footer_branch
                %221 = sbr.rel target = $region54
              $region59: #{tpu_custom_call.1} parent=51 // loop_exit
                _
            $region52: #{tpu_custom_call.1} parent=43 // pred_fallthru
              _
          $region44: #{tpu_custom_call.1} parent=39 // pred_fallthru
            _
          %273 = vnop
        $region40: #{tpu_custom_call.1} parent=35 // pred_fallthru
          _
      $region36: #{tpu_custom_call.1} parent=5 // pred_fallthru
        _
      %p274 = scmp.le.s32.totalorder 1, %s14
      %p275 = scmp.lt.s32.totalorder %s14, 3
      %p276 = pnand %p274, %p275
      %p277 = pneg %p276
      // Predicated region
      $region75: #{tpu_custom_call.1} parent=5 // pred_check
        _
      $region76: #{tpu_custom_call.1} parent=5 // pred_check_branch
        %279 = sbr.rel (%p276) target = $region78
      $region77: #{tpu_custom_call.1} parent=5 // pred_region
        %s280 = ssub.s32 %s14, 1
        %s281 = sand.u32 %s27, 1
        %s282 = sand.u32 %s27, 1
        %s283 = smul.addr %s282, 64
        %s284 = scalar_lea.vmem [#allocation3], %s283
        // Predicated region
        $region79: #{tpu_custom_call.1} parent=77 // pred_check
          %p285 = pneg %p40
        $region80: #{tpu_custom_call.1} parent=77 // pred_check_branch
          %287 = sbr.rel (%p285) target = $region82
        $region81: #{tpu_custom_call.1} parent=77 // pred_region
          _
        $region82: #{tpu_custom_call.1} parent=77 // pred_fallthru
          _
        %s288 = sand.u32 %s27, 1
        %s289 = sand.u32 %s27, 1
        %s290 = smul.addr %s289, 64
        %s291 = scalar_lea.vmem [#allocation3], %s290
        %p292 = pneg %p40
        %p293 = pneg %p37
        %p294 = pneg %p61
        %p295 = pneg %p58
        %p296 = pneg %p82
        %p297 = pneg %p79
        %p298 = pneg %p103
        %p299 = pneg %p100
        %p300 = pneg %p124
        %p301 = pneg %p121
        %p302 = pneg %p145
        %p303 = pneg %p142
        %p304 = pneg %p171
        %p305 = pneg %p168
        %p306 = scmp.lt.s32.totalorder %s19, 1
        %s307 = scalar_select %p306, %s19, 1
        %s308 = smul.addr %s307, 8
        %s309 = scalar_lea.vmem %s6, %s308
        %p310 = scmp.lt.s32.totalorder %s19, 1
        %s311 = scalar_select %p310, %s19, 1
        %s312 = smul.addr %s311, 8
        %s313 = scalar_lea.vmem %s6, %s312
        %v314 = vld [vmem:[%s284] sm:$0xff]
        %v315 = vld [vmem:[%s284 + $0x8] sm:$0xff]
        %v316 = vld [vmem:[%s284 + $0x10] sm:$0xff]
        %v317 = vld [vmem:[%s284 + $0x18] sm:$0xff]
        %v318 = vld [vmem:[%s284 + $0x20] sm:$0xff]
        %v319 = vld [vmem:[%s284 + $0x28] sm:$0xff]
        %v320 = vld [vmem:[%s284 + $0x30] sm:$0xff]
        %v321 = vld [vmem:[%s284 + $0x38] sm:$0xff]
        %v322 = vld [vmem:[%s1] sm:$0x1]
        %324 = vset.pattern.permute.xlu0 0
        %325 = vperm.xlu0 %324, %v314
        %v326 = vpop.permute.xlu0 %325
        %329 = vset.pattern.permute.xlu0 0
        %330 = vperm.xlu0 %329, %v315
        %v331 = vpop.permute.xlu0 %330
        %334 = vset.pattern.permute.xlu0 0
        %335 = vperm.xlu0 %334, %v316
        %v336 = vpop.permute.xlu0 %335
        %339 = vset.pattern.permute.xlu0 0
        %340 = vperm.xlu0 %339, %v317
        %v341 = vpop.permute.xlu0 %340
        %344 = vset.pattern.permute.xlu0 0
        %345 = vperm.xlu0 %344, %v318
        %v346 = vpop.permute.xlu0 %345
        %349 = vset.pattern.permute.xlu0 0
        %350 = vperm.xlu0 %349, %v319
        %v351 = vpop.permute.xlu0 %350
        %354 = vset.pattern.permute.xlu0 0
        %355 = vperm.xlu0 %354, %v320
        %v356 = vpop.permute.xlu0 %355
        %359 = vset.pattern.permute.xlu0 0
        %360 = vperm.xlu0 %359, %v321
        %v361 = vpop.permute.xlu0 %360
        %v364 = vlaneseq
        %v365 = vshrl.u32 %v364, 7
        %v366 = vsub.s32 0, %v365
        %v367 = vrot.slane %v322, %v366
        %v369 = vmul.f32 %v326, %v367
        %v370 = vmul.f32 %v331, %v367
        %v371 = vmul.f32 %v336, %v367
        %v372 = vmul.f32 %v341, %v367
        %v373 = vmul.f32 %v346, %v367
        %v374 = vmul.f32 %v351, %v367
        %v375 = vmul.f32 %v356, %v367
        %v376 = vmul.f32 %v361, %v367
        %v377 = vld [vmem:[%s3] sm:$0x1]
        %v379 = vlaneseq
        %v380 = vshrl.u32 %v379, 7
        %v381 = vsub.s32 0, %v380
        %v382 = vrot.slane %v377, %v381
        %v384 = vadd.f32 %v369, %v382
        %v385 = vadd.f32 %v370, %v382
        %v386 = vadd.f32 %v371, %v382
        %v387 = vadd.f32 %v372, %v382
        %v388 = vadd.f32 %v373, %v382
        %v389 = vadd.f32 %v374, %v382
        %v390 = vadd.f32 %v375, %v382
        %v391 = vadd.f32 %v376, %v382
        %v392 = vld [vmem:[%s2] sm:$0xff]
        %v393 = vld [vmem:[%s2 + $0x8] sm:$0xff]
        %v394 = vld [vmem:[%s2 + $0x10] sm:$0xff]
        %v395 = vld [vmem:[%s2 + $0x18] sm:$0xff]
        %vm396 = vcmask 261120
        %v398 = vsel %vm396, 0.0, 0
        %400 = vmatprep.subr.mxu0 0.0
        %401 = vmatpush1.msra.mxu0 %v392
        %402 = vmatprep.subr.mxu0 0.0
        %403 = vmatpush1.msra.mxu0 %v393
        %404 = vmatprep.subr.mxu0 0.0
        %405 = vmatpush1.msra.mxu0 %v394
        %406 = vmatprep.subr.mxu0 0.0
        %407 = vmatpush1.msra.mxu0 %v395
        %408 = vmatprep.subr.mxu0 0.0
        %409 = vmatpush1.msra.mxu0 0.0
        %410 = vmatprep.subr.mxu0 0.0
        %411 = vmatpush1.msra.mxu0 0.0
        %412 = vmatprep.subr.mxu0 0.0
        %413 = vmatpush1.msra.mxu0 0.0
        %414 = vmatprep.subr.mxu0 0.0
        %415 = vmatpush1.msra.mxu0 0.0
        %416 = vmatprep.subr.mxu0 0.0
        %417 = vmatpush1.msra.mxu0 0.0
        %418 = vmatprep.subr.mxu0 0.0
        %419 = vmatpush1.msra.mxu0 0.0
        %420 = vmatprep.subr.mxu0 0.0
        %421 = vmatpush1.msra.mxu0 0.0
        %422 = vmatprep.subr.mxu0 0.0
        %423 = vmatpush1.msra.mxu0 0.0
        %424 = vmatprep.subr.mxu0 0.0
        %425 = vmatpush1.msra.mxu0 0.0
        %426 = vmatprep.subr.mxu0 0.0
        %427 = vmatpush1.msra.mxu0 0.0
        %428 = vmatprep.subr.mxu0 0.0
        %429 = vmatpush1.msra.mxu0 0.0
        %430 = vmatprep.subr.mxu0 0.0
        %431 = vmatpush1.msra.mxu0 0.0
        %432 = vmatprep.subr.mxu0 0.0
        %433 = vmatpush1.msra.mxu0 0.0
        %434 = vmatprep.subr.mxu0 0.0
        %435 = vmatpush1.msra.mxu0 0.0
        %436 = vmatprep.subr.mxu0 0.0
        %437 = vmatpush1.msra.mxu0 0.0
        %438 = vmatprep.subr.mxu0 0.0
        %439 = vmatpush1.msra.mxu0 0.0
        %440 = vmatprep.subr.mxu0 0.0
        %441 = vmatpush1.msra.mxu0 0.0
        %442 = vmatprep.subr.mxu0 0.0
        %443 = vmatpush1.msra.mxu0 0.0
        %444 = vmatprep.subr.mxu0 0.0
        %445 = vmatpush1.msra.mxu0 0.0
        %446 = vmatprep.subr.mxu0 0.0
        %447 = vmatpush1.msra.mxu0 0.0
        %448 = vmatprep.subr.mxu0 0.0
        %449 = vmatpush1.msra.mxu0 0.0
        %450 = vmatprep.subr.mxu0 0.0
        %451 = vmatpush1.msra.mxu0 0.0
        %452 = vmatprep.subr.mxu0 0.0
        %453 = vmatpush1.msra.mxu0 0.0
        %454 = vmatprep.subr.mxu0 0.0
        %455 = vmatpush1.msra.mxu0 0.0
        %456 = vmatprep.subr.mxu0 0.0
        %457 = vmatpush1.msra.mxu0 0.0
        %458 = vmatprep.subr.mxu0 0.0
        %459 = vmatpush1.msra.mxu0 0.0
        %460 = vmatprep.subr.mxu0 0.0
        %461 = vmatpush1.msra.mxu0 0.0
        %462 = vmatprep.subr.mxu0 0.0
        %463 = vmatpush1.msra.mxu0 0.0
        %464 = vmatprep.mubr.f32.mxu0 0.0
        %465 = vmatmul.mubr.f32.gmra.mrb[0].mxu0 %v398
        %v466 = vpop.f32.mrb[0].mxu0
        %v467 = vadd.f32 0.0, %v466
        %v468 = vpop.f32.mrb[0].mxu0
        %469 = vdwg.mxu0
        %v470 = vadd.f32 %v384, %v467
        %v471 = vtanh.pop %v470
        %v472 = vmul.f32 %v471, 0.5
        %v473 = vadd.f32 %v472, 0.5
        %v474 = vmul.f32 %v473, 0.0
        %476 = vrot.lane.b32.xlu0 %v471, 64
        %v477 = vpop.permute.xlu0 %476
        %v479 = vmul.f32 %v473, %v477
        %481 = vrot.lane.b32.xlu0 %v479, 32
        %v482 = vpop.permute.xlu0 %481
        %v484 = vadd.f32 %v474, %v482
        %v485 = vtanh.pop %v484
        %487 = vrot.lane.b32.xlu0 %v485, 64
        %v488 = vpop.permute.xlu0 %487
        %v490 = vmul.f32 %v473, %v488
        %492 = vrot.lane.b32.xlu0 %v490, 32
        %v493 = vpop.permute.xlu0 %492
        %v494 = vsel %vm396, %v493, 0
        %496 = vmatprep.subr.mxu0 0.0
        %497 = vmatpush1.msra.mxu0 %v392
        %498 = vmatprep.subr.mxu0 0.0
        %499 = vmatpush1.msra.mxu0 %v393
        %500 = vmatprep.subr.mxu0 0.0
        %501 = vmatpush1.msra.mxu0 %v394
        %502 = vmatprep.subr.mxu0 0.0
        %503 = vmatpush1.msra.mxu0 %v395
        %504 = vmatprep.subr.mxu0 0.0
        %505 = vmatpush1.msra.mxu0 0.0
        %506 = vmatprep.subr.mxu0 0.0
        %507 = vmatpush1.msra.mxu0 0.0
        %508 = vmatprep.subr.mxu0 0.0
        %509 = vmatpush1.msra.mxu0 0.0
        %510 = vmatprep.subr.mxu0 0.0
        %511 = vmatpush1.msra.mxu0 0.0
        %512 = vmatprep.subr.mxu0 0.0
        %513 = vmatpush1.msra.mxu0 0.0
        %514 = vmatprep.subr.mxu0 0.0
        %515 = vmatpush1.msra.mxu0 0.0
        %516 = vmatprep.subr.mxu0 0.0
        %517 = vmatpush1.msra.mxu0 0.0
        %518 = vmatprep.subr.mxu0 0.0
        %519 = vmatpush1.msra.mxu0 0.0
        %520 = vmatprep.subr.mxu0 0.0
        %521 = vmatpush1.msra.mxu0 0.0
        %522 = vmatprep.subr.mxu0 0.0
        %523 = vmatpush1.msra.mxu0 0.0
        %524 = vmatprep.subr.mxu0 0.0
        %525 = vmatpush1.msra.mxu0 0.0
        %526 = vmatprep.subr.mxu0 0.0
        %527 = vmatpush1.msra.mxu0 0.0
        %528 = vmatprep.subr.mxu0 0.0
        %529 = vmatpush1.msra.mxu0 0.0
        %530 = vmatprep.subr.mxu0 0.0
        %531 = vmatpush1.msra.mxu0 0.0
        %532 = vmatprep.subr.mxu0 0.0
        %533 = vmatpush1.msra.mxu0 0.0
        %534 = vmatprep.subr.mxu0 0.0
        %535 = vmatpush1.msra.mxu0 0.0
        %536 = vmatprep.subr.mxu0 0.0
        %537 = vmatpush1.msra.mxu0 0.0
        %538 = vmatprep.subr.mxu0 0.0
        %539 = vmatpush1.msra.mxu0 0.0
        %540 = vmatprep.subr.mxu0 0.0
        %541 = vmatpush1.msra.mxu0 0.0
        %542 = vmatprep.subr.mxu0 0.0
        %543 = vmatpush1.msra.mxu0 0.0
        %544 = vmatprep.subr.mxu0 0.0
        %545 = vmatpush1.msra.mxu0 0.0
        %546 = vmatprep.subr.mxu0 0.0
        %547 = vmatpush1.msra.mxu0 0.0
        %548 = vmatprep.subr.mxu0 0.0
        %549 = vmatpush1.msra.mxu0 0.0
        %550 = vmatprep.subr.mxu0 0.0
        %551 = vmatpush1.msra.mxu0 0.0
        %552 = vmatprep.subr.mxu0 0.0
        %553 = vmatpush1.msra.mxu0 0.0
        %554 = vmatprep.subr.mxu0 0.0
        %555 = vmatpush1.msra.mxu0 0.0
        %556 = vmatprep.subr.mxu0 0.0
        %557 = vmatpush1.msra.mxu0 0.0
        %558 = vmatprep.subr.mxu0 0.0
        %559 = vmatpush1.msra.mxu0 0.0
        %560 = vmatprep.mubr.f32.mxu0 0.0
        %561 = vmatmul.mubr.f32.gmra.mrb[0].mxu0 %v494
        %v562 = vpop.f32.mrb[0].mxu0
        %v563 = vadd.f32 0.0, %v562
        %v564 = vpop.f32.mrb[0].mxu0
        %565 = vdwg.mxu0
        %v566 = vadd.f32 %v385, %v563
        %v567 = vtanh.pop %v566
        %v568 = vmul.f32 %v567, 0.5
        %v569 = vadd.f32 %v568, 0.5
        %v570 = vmul.f32 %v569, %v484
        %572 = vrot.lane.b32.xlu0 %v567, 64
        %v573 = vpop.permute.xlu0 %572
        %v575 = vmul.f32 %v569, %v573
        %577 = vrot.lane.b32.xlu0 %v575, 32
        %v578 = vpop.permute.xlu0 %577
        %v580 = vadd.f32 %v570, %v578
        %v581 = vtanh.pop %v580
        %583 = vrot.lane.b32.xlu0 %v581, 64
        %v584 = vpop.permute.xlu0 %583
        %v586 = vmul.f32 %v569, %v584
        %588 = vrot.lane.b32.xlu0 %v586, 32
        %v589 = vpop.permute.xlu0 %588
        %v590 = vsel %vm396, %v589, 0
        %592 = vmatprep.subr.mxu0 0.0
        %593 = vmatpush1.msra.mxu0 %v392
        %594 = vmatprep.subr.mxu0 0.0
        %595 = vmatpush1.msra.mxu0 %v393
        %596 = vmatprep.subr.mxu0 0.0
        %597 = vmatpush1.msra.mxu0 %v394
        %598 = vmatprep.subr.mxu0 0.0
        %599 = vmatpush1.msra.mxu0 %v395
        %600 = vmatprep.subr.mxu0 0.0
        %601 = vmatpush1.msra.mxu0 0.0
        %602 = vmatprep.subr.mxu0 0.0
        %603 = vmatpush1.msra.mxu0 0.0
        %604 = vmatprep.subr.mxu0 0.0
        %605 = vmatpush1.msra.mxu0 0.0
        %606 = vmatprep.subr.mxu0 0.0
        %607 = vmatpush1.msra.mxu0 0.0
        %608 = vmatprep.subr.mxu0 0.0
        %609 = vmatpush1.msra.mxu0 0.0
        %610 = vmatprep.subr.mxu0 0.0
        %611 = vmatpush1.msra.mxu0 0.0
        %612 = vmatprep.subr.mxu0 0.0
        %613 = vmatpush1.msra.mxu0 0.0
        %614 = vmatprep.subr.mxu0 0.0
        %615 = vmatpush1.msra.mxu0 0.0
        %616 = vmatprep.subr.mxu0 0.0
        %617 = vmatpush1.msra.mxu0 0.0
        %618 = vmatprep.subr.mxu0 0.0
        %619 = vmatpush1.msra.mxu0 0.0
        %620 = vmatprep.subr.mxu0 0.0
        %621 = vmatpush1.msra.mxu0 0.0
        %622 = vmatprep.subr.mxu0 0.0
        %623 = vmatpush1.msra.mxu0 0.0
        %624 = vmatprep.subr.mxu0 0.0
        %625 = vmatpush1.msra.mxu0 0.0
        %626 = vmatprep.subr.mxu0 0.0
        %627 = vmatpush1.msra.mxu0 0.0
        %628 = vmatprep.subr.mxu0 0.0
        %629 = vmatpush1.msra.mxu0 0.0
        %630 = vmatprep.subr.mxu0 0.0
        %631 = vmatpush1.msra.mxu0 0.0
        %632 = vmatprep.subr.mxu0 0.0
        %633 = vmatpush1.msra.mxu0 0.0
        %634 = vmatprep.subr.mxu0 0.0
        %635 = vmatpush1.msra.mxu0 0.0
        %636 = vmatprep.subr.mxu0 0.0
        %637 = vmatpush1.msra.mxu0 0.0
        %638 = vmatprep.subr.mxu0 0.0
        %639 = vmatpush1.msra.mxu0 0.0
        %640 = vmatprep.subr.mxu0 0.0
        %641 = vmatpush1.msra.mxu0 0.0
        %642 = vmatprep.subr.mxu0 0.0
        %643 = vmatpush1.msra.mxu0 0.0
        %644 = vmatprep.subr.mxu0 0.0
        %645 = vmatpush1.msra.mxu0 0.0
        %646 = vmatprep.subr.mxu0 0.0
        %647 = vmatpush1.msra.mxu0 0.0
        %648 = vmatprep.subr.mxu0 0.0
        %649 = vmatpush1.msra.mxu0 0.0
        %650 = vmatprep.subr.mxu0 0.0
        %651 = vmatpush1.msra.mxu0 0.0
        %652 = vmatprep.subr.mxu0 0.0
        %653 = vmatpush1.msra.mxu0 0.0
        %654 = vmatprep.subr.mxu0 0.0
        %655 = vmatpush1.msra.mxu0 0.0
        %656 = vmatprep.mubr.f32.mxu0 0.0
        %657 = vmatmul.mubr.f32.gmra.mrb[0].mxu0 %v590
        %v658 = vpop.f32.mrb[0].mxu0
        %v659 = vadd.f32 0.0, %v658
        %v660 = vpop.f32.mrb[0].mxu0
        %661 = vdwg.mxu0
        %v662 = vadd.f32 %v386, %v659
        %v663 = vtanh.pop %v662
        %v664 = vmul.f32 %v663, 0.5
        %v665 = vadd.f32 %v664, 0.5
        %v666 = vmul.f32 %v665, %v580
        %668 = vrot.lane.b32.xlu0 %v663, 64
        %v669 = vpop.permute.xlu0 %668
        %v671 = vmul.f32 %v665, %v669
        %673 = vrot.lane.b32.xlu0 %v671, 32
        %v674 = vpop.permute.xlu0 %673
        %v676 = vadd.f32 %v666, %v674
        %v677 = vtanh.pop %v676
        %679 = vrot.lane.b32.xlu0 %v677, 64
        %v680 = vpop.permute.xlu0 %679
        %v682 = vmul.f32 %v665, %v680
        %684 = vrot.lane.b32.xlu0 %v682, 32
        %v685 = vpop.permute.xlu0 %684
        %v686 = vsel %vm396, %v685, 0
        %688 = vmatprep.subr.mxu0 0.0
        %689 = vmatpush1.msra.mxu0 %v392
        %690 = vmatprep.subr.mxu0 0.0
        %691 = vmatpush1.msra.mxu0 %v393
        %692 = vmatprep.subr.mxu0 0.0
        %693 = vmatpush1.msra.mxu0 %v394
        %694 = vmatprep.subr.mxu0 0.0
        %695 = vmatpush1.msra.mxu0 %v395
        %696 = vmatprep.subr.mxu0 0.0
        %697 = vmatpush1.msra.mxu0 0.0
        %698 = vmatprep.subr.mxu0 0.0
        %699 = vmatpush1.msra.mxu0 0.0
        %700 = vmatprep.subr.mxu0 0.0
        %701 = vmatpush1.msra.mxu0 0.0
        %702 = vmatprep.subr.mxu0 0.0
        %703 = vmatpush1.msra.mxu0 0.0
        %704 = vmatprep.subr.mxu0 0.0
        %705 = vmatpush1.msra.mxu0 0.0
        %706 = vmatprep.subr.mxu0 0.0
        %707 = vmatpush1.msra.mxu0 0.0
        %708 = vmatprep.subr.mxu0 0.0
        %709 = vmatpush1.msra.mxu0 0.0
        %710 = vmatprep.subr.mxu0 0.0
        %711 = vmatpush1.msra.mxu0 0.0
        %712 = vmatprep.subr.mxu0 0.0
        %713 = vmatpush1.msra.mxu0 0.0
        %714 = vmatprep.subr.mxu0 0.0
        %715 = vmatpush1.msra.mxu0 0.0
        %716 = vmatprep.subr.mxu0 0.0
        %717 = vmatpush1.msra.mxu0 0.0
        %718 = vmatprep.subr.mxu0 0.0
        %719 = vmatpush1.msra.mxu0 0.0
        %720 = vmatprep.subr.mxu0 0.0
        %721 = vmatpush1.msra.mxu0 0.0
        %722 = vmatprep.subr.mxu0 0.0
        %723 = vmatpush1.msra.mxu0 0.0
        %724 = vmatprep.subr.mxu0 0.0
        %725 = vmatpush1.msra.mxu0 0.0
        %726 = vmatprep.subr.mxu0 0.0
        %727 = vmatpush1.msra.mxu0 0.0
        %728 = vmatprep.subr.mxu0 0.0
        %729 = vmatpush1.msra.mxu0 0.0
        %730 = vmatprep.subr.mxu0 0.0
        %731 = vmatpush1.msra.mxu0 0.0
        %732 = vmatprep.subr.mxu0 0.0
        %733 = vmatpush1.msra.mxu0 0.0
        %734 = vmatprep.subr.mxu0 0.0
        %735 = vmatpush1.msra.mxu0 0.0
        %736 = vmatprep.subr.mxu0 0.0
        %737 = vmatpush1.msra.mxu0 0.0
        %738 = vmatprep.subr.mxu0 0.0
        %739 = vmatpush1.msra.mxu0 0.0
        %740 = vmatprep.subr.mxu0 0.0
        %741 = vmatpush1.msra.mxu0 0.0
        %742 = vmatprep.subr.mxu0 0.0
        %743 = vmatpush1.msra.mxu0 0.0
        %744 = vmatprep.subr.mxu0 0.0
        %745 = vmatpush1.msra.mxu0 0.0
        %746 = vmatprep.subr.mxu0 0.0
        %747 = vmatpush1.msra.mxu0 0.0
        %748 = vmatprep.subr.mxu0 0.0
        %749 = vmatpush1.msra.mxu0 0.0
        %750 = vmatprep.subr.mxu0 0.0
        %751 = vmatpush1.msra.mxu0 0.0
        %752 = vmatprep.mubr.f32.mxu0 0.0
        %753 = vmatmul.mubr.f32.gmra.mrb[0].mxu0 %v686
        %v754 = vpop.f32.mrb[0].mxu0
        %v755 = vadd.f32 0.0, %v754
        %v756 = vpop.f32.mrb[0].mxu0
        %757 = vdwg.mxu0
        %v758 = vadd.f32 %v387, %v755
        %v759 = vtanh.pop %v758
        %v760 = vmul.f32 %v759, 0.5
        %v761 = vadd.f32 %v760, 0.5
        %v762 = vmul.f32 %v761, %v676
        %764 = vrot.lane.b32.xlu0 %v759, 64
        %v765 = vpop.permute.xlu0 %764
        %v767 = vmul.f32 %v761, %v765
        %769 = vrot.lane.b32.xlu0 %v767, 32
        %v770 = vpop.permute.xlu0 %769
        %v772 = vadd.f32 %v762, %v770
        %v773 = vtanh.pop %v772
        %775 = vrot.lane.b32.xlu0 %v773, 64
        %v776 = vpop.permute.xlu0 %775
        %v778 = vmul.f32 %v761, %v776
        %780 = vrot.lane.b32.xlu0 %v778, 32
        %v781 = vpop.permute.xlu0 %780
        %v782 = vsel %vm396, %v781, 0
        %784 = vmatprep.subr.mxu0 0.0
        %785 = vmatpush1.msra.mxu0 %v392
        %786 = vmatprep.subr.mxu0 0.0
        %787 = vmatpush1.msra.mxu0 %v393
        %788 = vmatprep.subr.mxu0 0.0
        %789 = vmatpush1.msra.mxu0 %v394
        %790 = vmatprep.subr.mxu0 0.0
        %791 = vmatpush1.msra.mxu0 %v395
        %792 = vmatprep.subr.mxu0 0.0
        %793 = vmatpush1.msra.mxu0 0.0
        %794 = vmatprep.subr.mxu0 0.0
        %795 = vmatpush1.msra.mxu0 0.0
        %796 = vmatprep.subr.mxu0 0.0
        %797 = vmatpush1.msra.mxu0 0.0
        %798 = vmatprep.subr.mxu0 0.0
        %799 = vmatpush1.msra.mxu0 0.0
        %800 = vmatprep.subr.mxu0 0.0
        %801 = vmatpush1.msra.mxu0 0.0
        %802 = vmatprep.subr.mxu0 0.0
        %803 = vmatpush1.msra.mxu0 0.0
        %804 = vmatprep.subr.mxu0 0.0
        %805 = vmatpush1.msra.mxu0 0.0
        %806 = vmatprep.subr.mxu0 0.0
        %807 = vmatpush1.msra.mxu0 0.0
        %808 = vmatprep.subr.mxu0 0.0
        %809 = vmatpush1.msra.mxu0 0.0
        %810 = vmatprep.subr.mxu0 0.0
        %811 = vmatpush1.msra.mxu0 0.0
        %812 = vmatprep.subr.mxu0 0.0
        %813 = vmatpush1.msra.mxu0 0.0
        %814 = vmatprep.subr.mxu0 0.0
        %815 = vmatpush1.msra.mxu0 0.0
        %816 = vmatprep.subr.mxu0 0.0
        %817 = vmatpush1.msra.mxu0 0.0
        %818 = vmatprep.subr.mxu0 0.0
        %819 = vmatpush1.msra.mxu0 0.0
        %820 = vmatprep.subr.mxu0 0.0
        %821 = vmatpush1.msra.mxu0 0.0
        %822 = vmatprep.subr.mxu0 0.0
        %823 = vmatpush1.msra.mxu0 0.0
        %824 = vmatprep.subr.mxu0 0.0
        %825 = vmatpush1.msra.mxu0 0.0
        %826 = vmatprep.subr.mxu0 0.0
        %827 = vmatpush1.msra.mxu0 0.0
        %828 = vmatprep.subr.mxu0 0.0
        %829 = vmatpush1.msra.mxu0 0.0
        %830 = vmatprep.subr.mxu0 0.0
        %831 = vmatpush1.msra.mxu0 0.0
        %832 = vmatprep.subr.mxu0 0.0
        %833 = vmatpush1.msra.mxu0 0.0
        %834 = vmatprep.subr.mxu0 0.0
        %835 = vmatpush1.msra.mxu0 0.0
        %836 = vmatprep.subr.mxu0 0.0
        %837 = vmatpush1.msra.mxu0 0.0
        %838 = vmatprep.subr.mxu0 0.0
        %839 = vmatpush1.msra.mxu0 0.0
        %840 = vmatprep.subr.mxu0 0.0
        %841 = vmatpush1.msra.mxu0 0.0
        %842 = vmatprep.subr.mxu0 0.0
        %843 = vmatpush1.msra.mxu0 0.0
        %844 = vmatprep.subr.mxu0 0.0
        %845 = vmatpush1.msra.mxu0 0.0
        %846 = vmatprep.subr.mxu0 0.0
        %847 = vmatpush1.msra.mxu0 0.0
        %848 = vmatprep.mubr.f32.mxu0 0.0
        %849 = vmatmul.mubr.f32.gmra.mrb[0].mxu0 %v782
        %v850 = vpop.f32.mrb[0].mxu0
        %v851 = vadd.f32 0.0, %v850
        %v852 = vpop.f32.mrb[0].mxu0
        %853 = vdwg.mxu0
        %v854 = vadd.f32 %v388, %v851
        %v855 = vtanh.pop %v854
        %v856 = vmul.f32 %v855, 0.5
        %v857 = vadd.f32 %v856, 0.5
        %v858 = vmul.f32 %v857, %v772
        %860 = vrot.lane.b32.xlu0 %v855, 64
        %v861 = vpop.permute.xlu0 %860
        %v863 = vmul.f32 %v857, %v861
        %865 = vrot.lane.b32.xlu0 %v863, 32
        %v866 = vpop.permute.xlu0 %865
        %v868 = vadd.f32 %v858, %v866
        %v869 = vtanh.pop %v868
        %871 = vrot.lane.b32.xlu0 %v869, 64
        %v872 = vpop.permute.xlu0 %871
        %v874 = vmul.f32 %v857, %v872
        %876 = vrot.lane.b32.xlu0 %v874, 32
        %v877 = vpop.permute.xlu0 %876
        %v878 = vsel %vm396, %v877, 0
        %880 = vmatprep.subr.mxu0 0.0
        %881 = vmatpush1.msra.mxu0 %v392
        %882 = vmatprep.subr.mxu0 0.0
        %883 = vmatpush1.msra.mxu0 %v393
        %884 = vmatprep.subr.mxu0 0.0
        %885 = vmatpush1.msra.mxu0 %v394
        %886 = vmatprep.subr.mxu0 0.0
        %887 = vmatpush1.msra.mxu0 %v395
        %888 = vmatprep.subr.mxu0 0.0
        %889 = vmatpush1.msra.mxu0 0.0
        %890 = vmatprep.subr.mxu0 0.0
        %891 = vmatpush1.msra.mxu0 0.0
        %892 = vmatprep.subr.mxu0 0.0
        %893 = vmatpush1.msra.mxu0 0.0
        %894 = vmatprep.subr.mxu0 0.0
        %895 = vmatpush1.msra.mxu0 0.0
        %896 = vmatprep.subr.mxu0 0.0
        %897 = vmatpush1.msra.mxu0 0.0
        %898 = vmatprep.subr.mxu0 0.0
        %899 = vmatpush1.msra.mxu0 0.0
        %900 = vmatprep.subr.mxu0 0.0
        %901 = vmatpush1.msra.mxu0 0.0
        %902 = vmatprep.subr.mxu0 0.0
        %903 = vmatpush1.msra.mxu0 0.0
        %904 = vmatprep.subr.mxu0 0.0
        %905 = vmatpush1.msra.mxu0 0.0
        %906 = vmatprep.subr.mxu0 0.0
        %907 = vmatpush1.msra.mxu0 0.0
        %908 = vmatprep.subr.mxu0 0.0
        %909 = vmatpush1.msra.mxu0 0.0
        %910 = vmatprep.subr.mxu0 0.0
        %911 = vmatpush1.msra.mxu0 0.0
        %912 = vmatprep.subr.mxu0 0.0
        %913 = vmatpush1.msra.mxu0 0.0
        %914 = vmatprep.subr.mxu0 0.0
        %915 = vmatpush1.msra.mxu0 0.0
        %916 = vmatprep.subr.mxu0 0.0
        %917 = vmatpush1.msra.mxu0 0.0
        %918 = vmatprep.subr.mxu0 0.0
        %919 = vmatpush1.msra.mxu0 0.0
        %920 = vmatprep.subr.mxu0 0.0
        %921 = vmatpush1.msra.mxu0 0.0
        %922 = vmatprep.subr.mxu0 0.0
        %923 = vmatpush1.msra.mxu0 0.0
        %924 = vmatprep.subr.mxu0 0.0
        %925 = vmatpush1.msra.mxu0 0.0
        %926 = vmatprep.subr.mxu0 0.0
        %927 = vmatpush1.msra.mxu0 0.0
        %928 = vmatprep.subr.mxu0 0.0
        %929 = vmatpush1.msra.mxu0 0.0
        %930 = vmatprep.subr.mxu0 0.0
        %931 = vmatpush1.msra.mxu0 0.0
        %932 = vmatprep.subr.mxu0 0.0
        %933 = vmatpush1.msra.mxu0 0.0
        %934 = vmatprep.subr.mxu0 0.0
        %935 = vmatpush1.msra.mxu0 0.0
        %936 = vmatprep.subr.mxu0 0.0
        %937 = vmatpush1.msra.mxu0 0.0
        %938 = vmatprep.subr.mxu0 0.0
        %939 = vmatpush1.msra.mxu0 0.0
        %940 = vmatprep.subr.mxu0 0.0
        %941 = vmatpush1.msra.mxu0 0.0
        %942 = vmatprep.subr.mxu0 0.0
        %943 = vmatpush1.msra.mxu0 0.0
        %944 = vmatprep.mubr.f32.mxu0 0.0
        %945 = vmatmul.mubr.f32.gmra.mrb[0].mxu0 %v878
        %v946 = vpop.f32.mrb[0].mxu0
        %v947 = vadd.f32 0.0, %v946
        %v948 = vpop.f32.mrb[0].mxu0
        %949 = vdwg.mxu0
        %v950 = vadd.f32 %v389, %v947
        %v951 = vtanh.pop %v950
        %v952 = vmul.f32 %v951, 0.5
        %v953 = vadd.f32 %v952, 0.5
        %v954 = vmul.f32 %v953, %v868
        %956 = vrot.lane.b32.xlu0 %v951, 64
        %v957 = vpop.permute.xlu0 %956
        %v959 = vmul.f32 %v953, %v957
        %961 = vrot.lane.b32.xlu0 %v959, 32
        %v962 = vpop.permute.xlu0 %961
        %v964 = vadd.f32 %v954, %v962
        %v965 = vtanh.pop %v964
        %967 = vrot.lane.b32.xlu0 %v965, 64
        %v968 = vpop.permute.xlu0 %967
        %v970 = vmul.f32 %v953, %v968
        %972 = vrot.lane.b32.xlu0 %v970, 32
        %v973 = vpop.permute.xlu0 %972
        %v974 = vsel %vm396, %v973, 0
        %976 = vmatprep.subr.mxu0 0.0
        %977 = vmatpush1.msra.mxu0 %v392
        %978 = vmatprep.subr.mxu0 0.0
        %979 = vmatpush1.msra.mxu0 %v393
        %980 = vmatprep.subr.mxu0 0.0
        %981 = vmatpush1.msra.mxu0 %v394
        %982 = vmatprep.subr.mxu0 0.0
        %983 = vmatpush1.msra.mxu0 %v395
        %984 = vmatprep.subr.mxu0 0.0
        %985 = vmatpush1.msra.mxu0 0.0
        %986 = vmatprep.subr.mxu0 0.0
        %987 = vmatpush1.msra.mxu0 0.0
        %988 = vmatprep.subr.mxu0 0.0
        %989 = vmatpush1.msra.mxu0 0.0
        %990 = vmatprep.subr.mxu0 0.0
        %991 = vmatpush1.msra.mxu0 0.0
        %992 = vmatprep.subr.mxu0 0.0
        %993 = vmatpush1.msra.mxu0 0.0
        %994 = vmatprep.subr.mxu0 0.0
        %995 = vmatpush1.msra.mxu0 0.0
        %996 = vmatprep.subr.mxu0 0.0
        %997 = vmatpush1.msra.mxu0 0.0
        %998 = vmatprep.subr.mxu0 0.0
        %999 = vmatpush1.msra.mxu0 0.0
        %1000 = vmatprep.subr.mxu0 0.0
        %1001 = vmatpush1.msra.mxu0 0.0
        %1002 = vmatprep.subr.mxu0 0.0
        %1003 = vmatpush1.msra.mxu0 0.0
        %1004 = vmatprep.subr.mxu0 0.0
        %1005 = vmatpush1.msra.mxu0 0.0
        %1006 = vmatprep.subr.mxu0 0.0
        %1007 = vmatpush1.msra.mxu0 0.0
        %1008 = vmatprep.subr.mxu0 0.0
        %1009 = vmatpush1.msra.mxu0 0.0
        %1010 = vmatprep.subr.mxu0 0.0
        %1011 = vmatpush1.msra.mxu0 0.0
        %1012 = vmatprep.subr.mxu0 0.0
        %1013 = vmatpush1.msra.mxu0 0.0
        %1014 = vmatprep.subr.mxu0 0.0
        %1015 = vmatpush1.msra.mxu0 0.0
        %1016 = vmatprep.subr.mxu0 0.0
        %1017 = vmatpush1.msra.mxu0 0.0
        %1018 = vmatprep.subr.mxu0 0.0
        %1019 = vmatpush1.msra.mxu0 0.0
        %1020 = vmatprep.subr.mxu0 0.0
        %1021 = vmatpush1.msra.mxu0 0.0
        %1022 = vmatprep.subr.mxu0 0.0
        %1023 = vmatpush1.msra.mxu0 0.0
        %1024 = vmatprep.subr.mxu0 0.0
        %1025 = vmatpush1.msra.mxu0 0.0
        %1026 = vmatprep.subr.mxu0 0.0
        %1027 = vmatpush1.msra.mxu0 0.0
        %1028 = vmatprep.subr.mxu0 0.0
        %1029 = vmatpush1.msra.mxu0 0.0
        %1030 = vmatprep.subr.mxu0 0.0
        %1031 = vmatpush1.msra.mxu0 0.0
        %1032 = vmatprep.subr.mxu0 0.0
        %1033 = vmatpush1.msra.mxu0 0.0
        %1034 = vmatprep.subr.mxu0 0.0
        %1035 = vmatpush1.msra.mxu0 0.0
        %1036 = vmatprep.subr.mxu0 0.0
        %1037 = vmatpush1.msra.mxu0 0.0
        %1038 = vmatprep.subr.mxu0 0.0
        %1039 = vmatpush1.msra.mxu0 0.0
        %1040 = vmatprep.mubr.f32.mxu0 0.0
        %1041 = vmatmul.mubr.f32.gmra.mrb[0].mxu0 %v974
        %v1042 = vpop.f32.mrb[0].mxu0
        %v1043 = vadd.f32 0.0, %v1042
        %v1044 = vpop.f32.mrb[0].mxu0
        %1045 = vdwg.mxu0
        %v1046 = vadd.f32 %v390, %v1043
        %v1047 = vtanh.pop %v1046
        %v1048 = vmul.f32 %v1047, 0.5
        %v1049 = vadd.f32 %v1048, 0.5
        %v1050 = vmul.f32 %v1049, %v964
        %1052 = vrot.lane.b32.xlu0 %v1047, 64
        %v1053 = vpop.permute.xlu0 %1052
        %v1055 = vmul.f32 %v1049, %v1053
        %1057 = vrot.lane.b32.xlu0 %v1055, 32
        %v1058 = vpop.permute.xlu0 %1057
        %v1060 = vadd.f32 %v1050, %v1058
        %v1061 = vtanh.pop %v1060
        %1063 = vrot.lane.b32.xlu0 %v1061, 64
        %v1064 = vpop.permute.xlu0 %1063
        %v1066 = vmul.f32 %v1049, %v1064
        %1068 = vrot.lane.b32.xlu0 %v1066, 32
        %v1069 = vpop.permute.xlu0 %1068
        %v1070 = vsel %vm396, %v1069, 0
        %1072 = vmatprep.subr.mxu0 0.0
        %1073 = vmatpush1.msra.mxu0 %v392
        %1074 = vmatprep.subr.mxu0 0.0
        %1075 = vmatpush1.msra.mxu0 %v393
        %1076 = vmatprep.subr.mxu0 0.0
        %1077 = vmatpush1.msra.mxu0 %v394
        %1078 = vmatprep.subr.mxu0 0.0
        %1079 = vmatpush1.msra.mxu0 %v395
        %1080 = vmatprep.subr.mxu0 0.0
        %1081 = vmatpush1.msra.mxu0 0.0
        %1082 = vmatprep.subr.mxu0 0.0
        %1083 = vmatpush1.msra.mxu0 0.0
        %1084 = vmatprep.subr.mxu0 0.0
        %1085 = vmatpush1.msra.mxu0 0.0
        %1086 = vmatprep.subr.mxu0 0.0
        %1087 = vmatpush1.msra.mxu0 0.0
        %1088 = vmatprep.subr.mxu0 0.0
        %1089 = vmatpush1.msra.mxu0 0.0
        %1090 = vmatprep.subr.mxu0 0.0
        %1091 = vmatpush1.msra.mxu0 0.0
        %1092 = vmatprep.subr.mxu0 0.0
        %1093 = vmatpush1.msra.mxu0 0.0
        %1094 = vmatprep.subr.mxu0 0.0
        %1095 = vmatpush1.msra.mxu0 0.0
        %1096 = vmatprep.subr.mxu0 0.0
        %1097 = vmatpush1.msra.mxu0 0.0
        %1098 = vmatprep.subr.mxu0 0.0
        %1099 = vmatpush1.msra.mxu0 0.0
        %1100 = vmatprep.subr.mxu0 0.0
        %1101 = vmatpush1.msra.mxu0 0.0
        %1102 = vmatprep.subr.mxu0 0.0
        %1103 = vmatpush1.msra.mxu0 0.0
        %1104 = vmatprep.subr.mxu0 0.0
        %1105 = vmatpush1.msra.mxu0 0.0
        %1106 = vmatprep.subr.mxu0 0.0
        %1107 = vmatpush1.msra.mxu0 0.0
        %1108 = vmatprep.subr.mxu0 0.0
        %1109 = vmatpush1.msra.mxu0 0.0
        %1110 = vmatprep.subr.mxu0 0.0
        %1111 = vmatpush1.msra.mxu0 0.0
        %1112 = vmatprep.subr.mxu0 0.0
        %1113 = vmatpush1.msra.mxu0 0.0
        %1114 = vmatprep.subr.mxu0 0.0
        %1115 = vmatpush1.msra.mxu0 0.0
        %1116 = vmatprep.subr.mxu0 0.0
        %1117 = vmatpush1.msra.mxu0 0.0
        %1118 = vmatprep.subr.mxu0 0.0
        %1119 = vmatpush1.msra.mxu0 0.0
        %1120 = vmatprep.subr.mxu0 0.0
        %1121 = vmatpush1.msra.mxu0 0.0
        %1122 = vmatprep.subr.mxu0 0.0
        %1123 = vmatpush1.msra.mxu0 0.0
        %1124 = vmatprep.subr.mxu0 0.0
        %1125 = vmatpush1.msra.mxu0 0.0
        %1126 = vmatprep.subr.mxu0 0.0
        %1127 = vmatpush1.msra.mxu0 0.0
        %1128 = vmatprep.subr.mxu0 0.0
        %1129 = vmatpush1.msra.mxu0 0.0
        %1130 = vmatprep.subr.mxu0 0.0
        %1131 = vmatpush1.msra.mxu0 0.0
        %1132 = vmatprep.subr.mxu0 0.0
        %1133 = vmatpush1.msra.mxu0 0.0
        %1134 = vmatprep.subr.mxu0 0.0
        %1135 = vmatpush1.msra.mxu0 0.0
        %1136 = vmatprep.mubr.f32.mxu0 0.0
        %1137 = vmatmul.mubr.f32.gmra.mrb[0].mxu0 %v1070
        %v1138 = vpop.f32.mrb[0].mxu0
        %v1139 = vadd.f32 0.0, %v1138
        %v1140 = vpop.f32.mrb[0].mxu0
        %1141 = vdwg.mxu0
        %v1142 = vadd.f32 %v391, %v1139
        %v1143 = vtanh.pop %v1142
        %v1144 = vmul.f32 %v1143, 0.5
        %v1145 = vadd.f32 %v1144, 0.5
        %v1146 = vmul.f32 %v1145, %v1060
        %1148 = vrot.lane.b32.xlu0 %v1143, 64
        %v1149 = vpop.permute.xlu0 %1148
        %v1151 = vmul.f32 %v1145, %v1149
        %1153 = vrot.lane.b32.xlu0 %v1151, 32
        %v1154 = vpop.permute.xlu0 %1153
        %v1156 = vadd.f32 %v1146, %v1154
        %v1157 = vtanh.pop %v1156
        %1159 = vrot.lane.b32.xlu0 %v1157, 64
        %v1160 = vpop.permute.xlu0 %1159
        %v1162 = vmul.f32 %v1145, %v1160
        %v1163 = vld [vmem:[%s4] sm:$0x1]
        %v1165 = vlaneseq
        %v1166 = vshrl.u32 %v1165, 7
        %v1167 = vsub.s32 0, %v1166
        %v1168 = vrot.slane %v1163, %v1167
        %1169 = vrot.lane.b32.xlu0 %v1168, 96
        %v1170 = vpop.permute.xlu0 %1169
        %v1172 = vmul.f32 %v1162, %v1170
        %1174 = vrot.lane.b32.xlu0 %v1172, 32
        %v1175 = vpop.permute.xlu0 %1174
        %v1177 = vsel %vm396, %v1175, 0.0
        %1178 = vadd.xlane.f32.xlu0 %v1177
        %v1179 = vpop.xlane.xlu0 %1178
        %v1180 = vld [vmem:[#allocation2] sm:$0x1]
        %v1182 = vlaneseq
        %v1183 = vshrl.u32 %v1182, 7
        %v1184 = vsub.s32 0, %v1183
        %v1185 = vrot.slane %v1180, %v1184
        %v1187 = vadd.f32 %v1179, %v1185
        %vm1188 = vcmask 7168
        %1189 = vst.msk [vmem:[%s313] sm:$0xff] %vm1188, %v1187
        %p1190 = scmp.lt.s32.totalorder %s19, 1
        %s1191 = scalar_select %p1190, %s19, 1
        %s1192 = smul.addr %s1191, 8
        %s1193 = scalar_lea.vmem %s6, %s1192
        // Predicated region
        $region83: #{tpu_custom_call.1} parent=77 // pred_check
          %p1194 = pneg %p168
        $region84: #{tpu_custom_call.1} parent=77 // pred_check_branch
          %1196 = sbr.rel (%p1194) target = $region86
        $region85: #{tpu_custom_call.1} parent=77 // pred_region
          _
        $region86: #{tpu_custom_call.1} parent=77 // pred_fallthru
          _
      $region78: #{tpu_custom_call.1} parent=5 // pred_fallthru
        _
      %p1197 = scmp.le.s32.totalorder 2, %s14
      // Predicated region
      $region87: #{tpu_custom_call.1} parent=5 // pred_check
        %p1198 = pneg %p1197
      $region88: #{tpu_custom_call.1} parent=5 // pred_check_branch
        %1200 = sbr.rel (%p1198) target = $region90
      $region89: #{tpu_custom_call.1} parent=5 // pred_region
        %s1201 = ssub.s32 %s14, 2
        // Predicated region
        $region91: #{tpu_custom_call.1} parent=89 // pred_check
          %p1202 = pneg %p174
        $region92: #{tpu_custom_call.1} parent=89 // pred_check_branch
          %1204 = sbr.rel (%p1202) target = $region94
        $region93: #{tpu_custom_call.1} parent=89 // pred_region
          %p1205 = scmp.lt.s32.totalorder %s20, 1
          %s1206 = scalar_select %p1205, %s20, 1
          %s1207 = smul.addr %s1206, 8
          %s1208 = scalar_lea.vmem %s6, %s1207
        $region94: #{tpu_custom_call.1} parent=89 // pred_fallthru
          _
      $region90: #{tpu_custom_call.1} parent=5 // pred_fallthru
        _
    $region6: #{tpu_custom_call.1} parent=1 // loop_footer
      %s18 = sadd.s32 1, %s14
    $region7: #{tpu_custom_call.1} parent=1 // loop_footer_branch
      %13 = sbr.rel target = $region3
    $region8: #{tpu_custom_call.1} parent=1 // loop_exit
      _

</llo_original>
